<compile_context>
chip_gen: v5e
topology: v5e:2x2
jax: 0.10.0
libtpu: 0.0.40
codegen_flags: <defaults>
</compile_context>

<pallas_src>
import functools
import numpy as np
import jax
import jax.numpy as jnp
from jax.experimental import pallas as pl
from jax.experimental.pallas import tpu as pltpu

BN_EPS = 1e-5
BN_SCALE = float(1.0 / np.sqrt(1.0 + BN_EPS))
NUM_CLASSES = 5
LAYER_STRIDES = (1, 2, 2, 2)
ACT_DT = jnp.bfloat16          # inter-layer activation dtype
NEG = -jnp.inf                 # per-channel lower bound meaning "no ReLU"
VMEM_LIMIT = 32 * 1024 * 1024  # explicit budget: safe on v5e/v6e/v7x


def _round_up(x, m):
    return ((x + m - 1) // m) * m


def _pick_tk(k, cap=1024):
    """Largest multiple of 128 <= cap that evenly divides round_up(k, 128)."""
    kp = _round_up(k, 128)
    for tk in range(min(cap, kp), 127, -128):
        if kp % tk == 0:
            return tk
    return 128


def _pad_to(x, shape):
    """Zero-pad x up to `shape`; no-op (no extra HBM traffic) when aligned."""
    pads = tuple((0, t - s) for s, t in zip(x.shape, shape))
    if not any(p[1] for p in pads):
        return x
    return jnp.pad(x, pads)


# ----------------------- Pallas kernels -----------------------

def _mm_kernel(*refs, has_res):
    """Tiled matmul: acc += A@B; epilogue y = max(acc*s + c (+res), lower)."""
    if has_res:
        a_ref, b_ref, s_ref, c_ref, lb_ref, r_ref, o_ref, acc_ref = refs
    else:
        a_ref, b_ref, s_ref, c_ref, lb_ref, o_ref, acc_ref = refs
        r_ref = None

    @pl.when(pl.program_id(2) == 0)
    def _():
        acc_ref[...] = jnp.zeros_like(acc_ref)

    acc_ref[...] += jnp.dot(a_ref[...], b_ref[...],
                            preferred_element_type=jnp.float32)

    @pl.when(pl.program_id(2) == pl.num_programs(2) - 1)
    def _():
        y = acc_ref[...] * s_ref[...] + c_ref[...]
        if has_res:
            y = y + r_ref[...].astype(jnp.float32)
        y = jnp.maximum(y, lb_ref[...])
        o_ref[...] = y.astype(o_ref.dtype)


def _conv_tap_kernel(a_ref, b_ref, s_ref, c_ref, lb_ref, o_ref, acc_ref,
                     *, kh, kw, dil, ho, wo8):
    """Stride-1 KxK conv.

    a_ref : (1, Hp, Wp, tk) padded input slab (one image, one Cin tile).
    b_ref : (kh, kw, tk, tn) weights.
    Each tap is a direct ref-window load (static pl.ds offsets) whose MXU dot
    is accumulated into the f32 scratch ref -- no kh-stacked operand, no live
    vreg accumulator across the 9 taps.
    """
    @pl.when(pl.program_id(2) == 0)
    def _():
        acc_ref[...] = jnp.zeros_like(acc_ref)

    tk = a_ref.shape[-1]
    for ih in range(kh):
        for iw in range(kw):
            a_win = a_ref[0, pl.ds(ih * dil, ho), pl.ds(iw * dil, wo8), :]
            acc_ref[...] += jnp.dot(a_win.reshape(ho * wo8, tk),
                                    b_ref[ih, iw],
                                    preferred_element_type=jnp.float32)

    @pl.when(pl.program_id(2) == pl.num_programs(2) - 1)
    def _():
        y = acc_ref[...] * s_ref[...] + c_ref[...]
        y = jnp.maximum(y, lb_ref[...])
        o_ref[...] = y.astype(o_ref.dtype)


# ----------------------- Matmul / conv wrappers -----------------------

def matmul_fused(a, b, scale, shift, lower, residual=None, out_dtype=ACT_DT):
    """max((a @ b) * scale + shift (+ residual), lower) with bf16 MXU inputs."""
    M, K = a.shape
    _, N = b.shape
    tiny_m = M <= 64                       # deep-backbone / ASPP tail calls

    tm = min(512, _round_up(M, 8))
    Mp = _round_up(M, tm)
    Np = _round_up(N, 128)
    Kp = _round_up(K, 128)

    tn = 128
    for cand in ((512, 256, 128) if tiny_m else (256, 128)):
        if cand <= Np and Np % cand == 0:
            tn = cand
            break
    tk = _pick_tk(K, cap=(2048 if tiny_m else 1024))

    # v7x: keep at least one "parallel" grid axis with extent >= 2 when it is
    # free to do so (otherwise one of the two TensorCores idles).
    while Mp // tm < 2 and Np // tn < 2 and tn > 128 and Np % (tn // 2) == 0:
        tn //= 2

    a_p = _pad_to(a.astype(jnp.bfloat16), (Mp, Kp))
    b_p = _pad_to(b.astype(jnp.bfloat16), (Kp, Np))
    s_p = _pad_to(scale.astype(jnp.float32).reshape(1, N), (1, Np))
    c_p = _pad_to(shift.astype(jnp.float32).reshape(1, N), (1, Np))
    l_p = _pad_to(lower.astype(jnp.float32).reshape(1, N), (1, Np))

    in_specs = [pl.BlockSpec((tm, tk), lambda i, j, k: (i, k)),
                pl.BlockSpec((tk, tn), lambda i, j, k: (k, j)),
                pl.BlockSpec((1, tn), lambda i, j, k: (0, j)),
                pl.BlockSpec((1, tn), lambda i, j, k: (0, j)),
                pl.BlockSpec((1, tn), lambda i, j, k: (0, j))]
    args = [a_p, b_p, s_p, c_p, l_p]
    has_res = residual is not None
    if has_res:
        r_p = _pad_to(residual.astype(jnp.bfloat16), (Mp, Np))
        in_specs.append(pl.BlockSpec((tm, tn), lambda i, j, k: (i, j)))
        args.append(r_p)

    grid = (Mp // tm, Np // tn, Kp // tk)
    out = pl.pallas_call(
        functools.partial(_mm_kernel, has_res=has_res),
        out_shape=jax.ShapeDtypeStruct((Mp, Np), out_dtype),
        grid_spec=pltpu.PrefetchScalarGridSpec(
            num_scalar_prefetch=0,
            grid=grid,
            in_specs=in_specs,
            out_specs=pl.BlockSpec((tm, tn), lambda i, j, k: (i, j)),
            scratch_shapes=[pltpu.VMEM((tm, tn), jnp.float32)]),
        compiler_params=pltpu.CompilerParams(
            dimension_semantics=("parallel", "parallel", "arbitrary"),
            vmem_limit_bytes=VMEM_LIMIT),
    )(*args)
    if (Mp, Np) != (M, N):
        out = out[:M, :N]
    return out


def conv1x1(x, w, *, scale=None, shift=None, lower=None, residual=None,
            stride=1, out_dtype=ACT_DT):
    """1x1 conv (optionally strided) as a plain fused matmul (no im2col)."""
    if stride != 1:
        x = x[:, ::stride, ::stride, :]
    n, h, wd, cin = x.shape
    cout = w.shape[-1]
    a = x.reshape(n * h * wd, cin)
    if scale is None:
        scale = jnp.ones((cout,), jnp.float32)
    if shift is None:
        shift = jnp.zeros((cout,), jnp.float32)
    if lower is None:
        lower = jnp.full((cout,), NEG, jnp.float32)
    r = None if residual is None else residual.reshape(n * h * wd, cout)
    out = matmul_fused(a, w.reshape(cin, cout), scale, shift, lower, r,
                       out_dtype)
    return out.reshape(n, h, wd, cout)


def conv_kxk_s1(x, w, *, padding, dilation=1, scale, shift, lower,
                out_dtype=ACT_DT):
    """Stride-1 KxK conv via the tap-accumulating Pallas kernel.

    The padded NHWC activation is passed once; the KH*KW taps are taken
    in-kernel as ref windows (no kh-stacked host-side copies)."""
    n, h, wd, cin = x.shape
    kh, kw, _, cout = w.shape
    d = dilation
    ho = h + 2 * padding - d * (kh - 1)
    wo = wd + 2 * padding - d * (kw - 1)
    wo8 = _round_up(wo, 8)                       # lane-dense / sublane-aligned
    hp = h + 2 * padding                         # padded input height
    wp = _round_up((kw - 1) * d + wo8, 8)        # padded input width (covers all W-taps)

    tk = _pick_tk(cin, cap=512)
    cinp = _round_up(cin, tk)
    coutp = _round_up(cout, 128)
    tn = 256 if coutp % 256 == 0 else 128

    # single spatial + channel pad (zeros), read once by the pipeline
    xp = jnp.pad(x.astype(jnp.bfloat16),
                 ((0, 0), (padding, padding),
                  (padding, wp - wd - padding), (0, cinp - cin)))

    b = _pad_to(w.astype(jnp.bfloat16), (kh, kw, cinp, coutp))
    s_p = _pad_to(scale.astype(jnp.float32).reshape(1, cout), (1, coutp))
    c_p = _pad_to(shift.astype(jnp.float32).reshape(1, cout), (1, coutp))
    l_p = _pad_to(lower.astype(jnp.float32).reshape(1, cout), (1, coutp))

    rows_blk = ho * wo8                          # output rows per image
    grid = (n, coutp // tn, cinp // tk)

    out = pl.pallas_call(
        functools.partial(_conv_tap_kernel, kh=kh, kw=kw, dil=d,
                          ho=ho, wo8=wo8),
        out_shape=jax.ShapeDtypeStruct((n * rows_blk, coutp), out_dtype),
        grid_spec=pltpu.PrefetchScalarGridSpec(
            num_scalar_prefetch=0,
            grid=grid,
            in_specs=[pl.BlockSpec((1, hp, wp, tk),
                                   lambda b, j, k: (b, 0, 0, k)),
                      pl.BlockSpec((kh, kw, tk, tn),
                                   lambda b, j, k: (0, 0, k, j)),
                      pl.BlockSpec((1, tn), lambda b, j, k: (0, j)),
                      pl.BlockSpec((1, tn), lambda b, j, k: (0, j)),
                      pl.BlockSpec((1, tn), lambda b, j, k: (0, j))],
            out_specs=pl.BlockSpec((rows_blk, tn), lambda b, j, k: (b, j)),
            scratch_shapes=[pltpu.VMEM((rows_blk, tn), jnp.float32)]),
        compiler_params=pltpu.CompilerParams(
            dimension_semantics=("parallel", "parallel", "arbitrary"),
            vmem_limit_bytes=VMEM_LIMIT),
    )(xp, b, s_p, c_p, l_p)

    out = out.reshape(n, ho, wo8, coutp)[:, :, :wo, :cout]
    return out


def conv_im2col(x, w, *, stride=1, padding=0, dilation=1,
                scale, shift, lower, out_dtype=ACT_DT):
    """Fallback for strided KxK convs (conv1 7x7/s2 and the three 3x3/s2).

    TODO(synk): at large input resolutions fold the tap loop into the kernel
    (or space-to-depth the input) instead of materializing the im2col concat;
    negligible at the small spatial sizes used here."""
    n, h, wd, cin = x.shape
    kh, kw, _, cout = w.shape
    ho = (h + 2 * padding - dilation * (kh - 1) - 1) // stride + 1
    wo = (wd + 2 * padding - dilation * (kw - 1) - 1) // stride + 1
    xp = jnp.pad(x.astype(jnp.bfloat16),
                 ((0, 0), (padding, padding), (padding, padding), (0, 0)))
    taps = []
    for ih in range(kh):
        for iw in range(kw):
            h0 = ih * dilation
            w0 = iw * dilation
            taps.append(xp[:, h0:h0 + (ho - 1) * stride + 1:stride,
                           w0:w0 + (wo - 1) * stride + 1:stride, :])
    a = taps[0] if len(taps) == 1 else jnp.concatenate(taps, axis=-1)
    a = a.reshape(n * ho * wo, kh * kw * cin)
    b = w.reshape(kh * kw * cin, cout)
    out = matmul_fused(a, b, scale, shift, lower, None, out_dtype)
    return out.reshape(n, ho, wo, cout)


def _bn_vecs(cout, relu):
    scale = jnp.full((cout,), BN_SCALE, jnp.float32)
    shift = jnp.zeros((cout,), jnp.float32)
    lower = (jnp.zeros((cout,), jnp.float32) if relu
             else jnp.full((cout,), NEG, jnp.float32))
    return scale, shift, lower


def conv_bn_1x1(x, w, *, relu=True, stride=1, residual=None,
                out_dtype=ACT_DT):
    cout = w.shape[-1]
    s, c, lb = _bn_vecs(cout, relu)
    return conv1x1(x, w, scale=s, shift=c, lower=lb, residual=residual,
                   stride=stride, out_dtype=out_dtype)


def conv_bn_kxk(x, w, *, stride=1, padding=0, dilation=1, relu=True,
                out_dtype=ACT_DT):
    cout = w.shape[-1]
    s, c, lb = _bn_vecs(cout, relu)
    if stride == 1:
        return conv_kxk_s1(x, w, padding=padding, dilation=dilation,
                           scale=s, shift=c, lower=lb, out_dtype=out_dtype)
    return conv_im2col(x, w, stride=stride, padding=padding,
                       dilation=dilation, scale=s, shift=c, lower=lb,
                       out_dtype=out_dtype)


# ----------------------- Non-matmul glue -----------------------

def maxpool_3x3_s2_p1(x):
    """MaxPool2d(3, stride=2, padding=1) as a fused 9-way jnp.maximum chain."""
    n, h, w, c = x.shape
    ho = (h + 2 - 3) // 2 + 1
    wo = (w + 2 - 3) // 2 + 1
    xp = jnp.pad(x, ((0, 0), (1, 1), (1, 1), (0, 0)),
                 constant_values=-jnp.inf)
    out = None
    for kh in range(3):
        for kw in range(3):
            tap = xp[:, kh:kh + (ho - 1) * 2 + 1:2,
                     kw:kw + (wo - 1) * 2 + 1:2, :]
            out = tap if out is None else jnp.maximum(out, tap)
    return out


def bilinear_resize(x, oh, ow, align_corners):
    """F.interpolate(mode='bilinear'); gather + lerp glue (not the hot path)."""
    n, h, w, c = x.shape
    if (h, w) == (oh, ow):
        return x

    def src_coords(out_size, in_size):
        i = jnp.arange(out_size, dtype=jnp.float32)
        if align_corners:
            if out_size == 1:
                return jnp.zeros((1,), jnp.float32)
            return i * (in_size - 1) / (out_size - 1)
        s = (i + 0.5) * (in_size / out_size) - 0.5
        return jnp.clip(s, 0.0, in_size - 1.0)

    ys = src_coords(oh, h)
    xs = src_coords(ow, w)
    y0 = jnp.floor(ys).astype(jnp.int32)
    x0 = jnp.floor(xs).astype(jnp.int32)
    y1 = jnp.minimum(y0 + 1, h - 1)
    x1 = jnp.minimum(x0 + 1, w - 1)
    wy = (ys - y0.astype(jnp.float32))[None, :, None, None]
    wx = (xs - x0.astype(jnp.float32))[None, None, :, None]
    r0 = jnp.take(x, y0, axis=1)
    r1 = jnp.take(x, y1, axis=1)
    rows = r0 * (1.0 - wy) + r1 * wy
    c0 = jnp.take(rows, x0, axis=2)
    c1 = jnp.take(rows, x1, axis=2)
    return c0 * (1.0 - wx) + c1 * wx


# ----------------------- Model -----------------------

def bottleneck(x, blk, stride):
    width = blk['w2'].shape[-1]
    if 'wd' in blk:
        if stride == 1:
            # Merge downsample + conv1 into one matmul (x is read once).
            # Weights ordered [wd, w1] so the channel split lands on a
            # 128-lane boundary (4*width), making the two slices near-free.
            wcat = jnp.concatenate([blk['wd'], blk['w1']], axis=-1)
            cout = 5 * width
            scale = jnp.full((cout,), BN_SCALE, jnp.float32)
            shift = jnp.zeros((cout,), jnp.float32)
            lower = jnp.concatenate(
                [jnp.full((4 * width,), NEG, jnp.float32),   # identity: no ReLU
                 jnp.zeros((width,), jnp.float32)])          # conv1: ReLU
            y = conv1x1(x, wcat, scale=scale, shift=shift, lower=lower)
            identity = y[..., :4 * width]
            out = y[..., 4 * width:]
        else:
            out = conv_bn_1x1(x, blk['w1'], relu=True)
            identity = conv_bn_1x1(x, blk['wd'], relu=False, stride=stride)
    else:
        out = conv_bn_1x1(x, blk['w1'], relu=True)
        identity = x

    out = conv_bn_kxk(out, blk['w2'], stride=stride, padding=1, relu=True)

    # third 1x1 conv: BN + residual add + ReLU fused into the matmul epilogue
    cout = blk['w3'].shape[-1]
    scale = jnp.full((cout,), BN_SCALE, jnp.float32)
    shift = jnp.zeros((cout,), jnp.float32)
    lower = jnp.zeros((cout,), jnp.float32)
    return conv1x1(out, blk['w3'], scale=scale, shift=shift, lower=lower,
                   residual=identity)


def make_params(key):
    counter = [0]

    def nk():
        k = jax.random.fold_in(key, counter[0])
        counter[0] += 1
        return k

    def kaiming(kh, kw, cin, cout):
        fan_out = kh * kw * cout
        w = (jax.random.normal(nk(), (kh, kw, cin, cout), jnp.float32)
             * np.sqrt(2.0 / fan_out))
        return w.astype(jnp.bfloat16)

    p = {}
    p['conv1'] = kaiming(7, 7, 3, 64)
    layer_cfg = [(64, 64, 3), (256, 128, 4), (512, 256, 6), (1024, 512, 3)]
    p['layers'] = []
    for inp, width, nblocks in layer_cfg:
        blocks = []
        for b in range(nblocks):
            cin = inp if b == 0 else width * 4
            blk = {'w1': kaiming(1, 1, cin, width),
                   'w2': kaiming(3, 3, width, width),
                   'w3': kaiming(1, 1, width, width * 4)}
            if b == 0:
                blk['wd'] = kaiming(1, 1, cin, width * 4)
            blocks.append(blk)
        p['layers'].append(blocks)
    # ASPP(2048, 256, rates=[6,12,18])
    p['aspp0'] = kaiming(1, 1, 2048, 256)
    p['aspp1'] = kaiming(3, 3, 2048, 256)
    p['aspp2'] = kaiming(3, 3, 2048, 256)
    p['aspp3'] = kaiming(3, 3, 2048, 256)
    p['aspp_pool'] = kaiming(1, 1, 2048, 256)
    p['aspp_proj'] = kaiming(1, 1, 5 * 256, 256)
    # low-level conv + decoder
    p['low'] = kaiming(1, 1, 64, 48)
    p['dec1'] = kaiming(3, 3, 304, 256)
    p['dec2'] = kaiming(3, 3, 256, 256)
    p['dec3_w'] = kaiming(1, 1, 256, NUM_CLASSES)
    bound = 1.0 / np.sqrt(256.0)
    p['dec3_b'] = jax.random.uniform(nk(), (NUM_CLASSES,), jnp.float32,
                                     minval=-bound, maxval=bound)
    return p


def deeplabv3plus_forward(params, x_nchw):
    x = jnp.transpose(x_nchw.astype(jnp.float32), (0, 2, 3, 1))  # NCHW -> NHWC
    rgb = x[..., :3].astype(ACT_DT)
    # edge_input = x[..., 3:]  # computed but never used in the reference forward

    # --- backbone stem ---
    y = conv_bn_kxk(rgb, params['conv1'], stride=2, padding=3, relu=True)
    low = maxpool_3x3_s2_p1(y)            # backbone.maxpool output (64 ch)

    # --- backbone layers 1..4 ---
    h = low
    for li, blocks in enumerate(params['layers']):
        for bi, blk in enumerate(blocks):
            h = bottleneck(h, blk, LAYER_STRIDES[li] if bi == 0 else 1)

    # --- ASPP ---
    hh, ww = h.shape[1], h.shape[2]
    b0 = conv_bn_1x1(h, params['aspp0'], relu=True)
    b1 = conv_bn_kxk(h, params['aspp1'], padding=6, dilation=6, relu=True)
    b2 = conv_bn_kxk(h, params['aspp2'], padding=12, dilation=12, relu=True)
    b3 = conv_bn_kxk(h, params['aspp3'], padding=18, dilation=18, relu=True)
    pooled = jnp.mean(h.astype(jnp.float32), axis=(1, 2),
                      keepdims=True).astype(ACT_DT)        # AdaptiveAvgPool2d(1)
    g = conv_bn_1x1(pooled, params['aspp_pool'], relu=True)
    g = bilinear_resize(g, hh, ww, align_corners=False).astype(ACT_DT)
    aspp = jnp.concatenate([b0, b1, b2, b3, g], axis=-1)
    aspp = conv_bn_1x1(aspp, params['aspp_proj'], relu=True)
    # TODO(synk): Dropout(0.5) in ASPP.project is train-mode stochastic in the
    # reference; eval-mode identity is used here.

    # --- decoder ---
    low_f = conv_bn_1x1(low, params['low'], relu=True)
    aspp_up = bilinear_resize(aspp, low_f.shape[1], low_f.shape[2],
                              align_corners=True).astype(ACT_DT)
    comb = jnp.concatenate([aspp_up, low_f], axis=-1)      # 256 + 48 = 304
    d = conv_bn_kxk(comb, params['dec1'], padding=1, relu=True)
    d = conv_bn_kxk(d, params['dec2'], padding=1, relu=True)
    out = conv1x1(d, params['dec3_w'],
                  scale=jnp.ones((NUM_CLASSES,), jnp.float32),
                  shift=params['dec3_b'],
                  lower=jnp.full((NUM_CLASSES,), NEG, jnp.float32),
                  out_dtype=jnp.float32)
    out = bilinear_resize(out, x.shape[1], x.shape[2], align_corners=True)
    return jnp.transpose(out, (0, 3, 1, 2))                # NHWC -> NCHW


if __name__ == "__main__":
    key = jax.random.PRNGKey(0)
    params = make_params(jax.random.fold_in(key, 1))
    x = jax.random.normal(jax.random.fold_in(key, 2), (2, 4, 64, 64),
                          dtype=jnp.float32)
    out = deeplabv3plus_forward(params, x)
    out = jax.block_until_ready(out)
    assert out.shape == (2, NUM_CLASSES, 64, 64), out.shape
    assert bool(jnp.all(jnp.isfinite(out)))
    print("KERNEL_OK")
</pallas_src>

<mosaic_0001>
module attributes {stable_mosaic.version = 11 : i64} {
  func.func @_mm_kernel(%arg0: i32, %arg1: i32, %arg2: i32, %arg3: memref<512x256xbf16, #tpu.memory_space<vmem>>, %arg4: memref<256x128xbf16, #tpu.memory_space<vmem>>, %arg5: memref<1x128xf32, #tpu.memory_space<vmem>>, %arg6: memref<1x128xf32, #tpu.memory_space<vmem>>, %arg7: memref<1x128xf32, #tpu.memory_space<vmem>>, %arg8: memref<512x128xbf16, #tpu.memory_space<vmem>>, %arg9: memref<512x128xf32, #tpu.memory_space<vmem>>) attributes {dimension_semantics = [#tpu.dimension_semantics<parallel>, #tpu.dimension_semantics<parallel>, #tpu.dimension_semantics<arbitrary>], iteration_bounds = array<i64: 4, 1, 1>, scalar_prefetch = 0 : i64, scratch_operands = 1 : i64, tpu.core_type = #tpu.core_type<tc>, window_params = [{transform_indices = @transform_0, window_bounds = array<i64: 512, 256>}, {transform_indices = @transform_1, window_bounds = array<i64: 256, 128>}, {transform_indices = @transform_2, window_bounds = array<i64: 1, 128>}, {transform_indices = @transform_3, window_bounds = array<i64: 1, 128>}, {transform_indices = @transform_4, window_bounds = array<i64: 1, 128>}, {transform_indices = @transform_5, window_bounds = array<i64: 512, 128>}]} {
    %c0_i32 = arith.constant 0 : i32
    %0 = arith.cmpi eq, %arg2, %c0_i32 : i32
    %1 = arith.extui %0 : i1 to i32
    %c0_i32_0 = arith.constant 0 : i32
    %2 = arith.cmpi ne, %1, %c0_i32_0 : i32
    scf.if %2 {
      %cst_10 = arith.constant 0.000000e+00 : f32
      %12 = vector.broadcast %cst_10 : f32 to vector<512x128xf32>
      %c0_11 = arith.constant 0 : index
      %c0_12 = arith.constant 0 : index
      %13 = vector.load %arg9[%c0_11, %c0_12] : memref<512x128xf32, #tpu.memory_space<vmem>>, vector<512x128xf32>
      tpu.vector_store %arg9[%c0_11, %c0_12], %12 {strides = array<i32>} : memref<512x128xf32, #tpu.memory_space<vmem>>, vector<512x128xf32>,
    } else {
    }
    %c0 = arith.constant 0 : index
    %c0_1 = arith.constant 0 : index
    %3 = vector.load %arg9[%c0, %c0_1] : memref<512x128xf32, #tpu.memory_space<vmem>>, vector<512x128xf32>
    %c0_2 = arith.constant 0 : index
    %c0_3 = arith.constant 0 : index
    %4 = vector.load %arg3[%c0_2, %c0_3] : memref<512x256xbf16, #tpu.memory_space<vmem>>, vector<512x256xbf16>
    %c0_4 = arith.constant 0 : index
    %c0_5 = arith.constant 0 : index
    %5 = vector.load %arg4[%c0_4, %c0_5] : memref<256x128xbf16, #tpu.memory_space<vmem>>, vector<256x128xbf16>
    %cst = arith.constant dense<0.000000e+00> : vector<512x128xf32>
    %6 = tpu.matmul %4, %5, %cst {dimension_numbers = #tpu.dot_dimension_numbers<[1], [0], [0], [1], [0, 0, 1, 1], [], []>} : vector<512x256xbf16>, vector<256x128xbf16>, vector<512x128xf32> -> vector<512x128xf32>
    %7 = arith.addf %3, %6 : vector<512x128xf32>
    %c0_6 = arith.constant 0 : index
    %c0_7 = arith.constant 0 : index
    %8 = vector.load %arg9[%c0_6, %c0_7] : memref<512x128xf32, #tpu.memory_space<vmem>>, vector<512x128xf32>
    tpu.vector_store %arg9[%c0_6, %c0_7], %7 {strides = array<i32>} : memref<512x128xf32, #tpu.memory_space<vmem>>, vector<512x128xf32>,
    %c0_i32_8 = arith.constant 0 : i32
    %9 = arith.cmpi eq, %arg2, %c0_i32_8 : i32
    %10 = arith.extui %9 : i1 to i32
    %c0_i32_9 = arith.constant 0 : i32
    %11 = arith.cmpi ne, %10, %c0_i32_9 : i32
    scf.if %11 {
      %c0_10 = arith.constant 0 : index
      %c0_11 = arith.constant 0 : index
      %12 = vector.load %arg9[%c0_10, %c0_11] : memref<512x128xf32, #tpu.memory_space<vmem>>, vector<512x128xf32>
      %c0_12 = arith.constant 0 : index
      %c0_13 = arith.constant 0 : index
      %13 = vector.load %arg5[%c0_12, %c0_13] : memref<1x128xf32, #tpu.memory_space<vmem>>, vector<1x128xf32>
      %14 = vector.broadcast %13 : vector<1x128xf32> to vector<512x128xf32>
      %15 = arith.mulf %12, %14 : vector<512x128xf32>
      %c0_14 = arith.constant 0 : index
      %c0_15 = arith.constant 0 : index
      %16 = vector.load %arg6[%c0_14, %c0_15] : memref<1x128xf32, #tpu.memory_space<vmem>>, vector<1x128xf32>
      %17 = vector.broadcast %16 : vector<1x128xf32> to vector<512x128xf32>
      %18 = arith.addf %15, %17 : vector<512x128xf32>
      %c0_16 = arith.constant 0 : index
      %c0_17 = arith.constant 0 : index
      %19 = vector.load %arg7[%c0_16, %c0_17] : memref<1x128xf32, #tpu.memory_space<vmem>>, vector<1x128xf32>
      %20 = vector.broadcast %19 : vector<1x128xf32> to vector<512x128xf32>
      %21 = arith.maximumf %18, %20 : vector<512x128xf32>
      %22 = arith.truncf %21 : vector<512x128xf32> to vector<512x128xbf16>
      %c0_18 = arith.constant 0 : index
      %c0_19 = arith.constant 0 : index
      %23 = vector.load %arg8[%c0_18, %c0_19] : memref<512x128xbf16, #tpu.memory_space<vmem>>, vector<512x128xbf16>
      tpu.vector_store %arg8[%c0_18, %c0_19], %22 {strides = array<i32>} : memref<512x128xbf16, #tpu.memory_space<vmem>>, vector<512x128xbf16>,
    } else {
    }
    return
  }
  func.func @transform_0(%arg0: i32, %arg1: i32, %arg2: i32) -> (i32, i32) {
    %c0_i32 = arith.constant 0 : i32
    return %arg0, %arg2 : i32, i32
  }
  func.func @transform_1(%arg0: i32, %arg1: i32, %arg2: i32) -> (i32, i32) {
    %c0_i32 = arith.constant 0 : i32
    return %arg2, %arg1 : i32, i32
  }
  func.func @transform_2(%arg0: i32, %arg1: i32, %arg2: i32) -> (i32, i32) {
    %c0_i32 = arith.constant 0 : i32
    %c0_i32_0 = arith.constant 0 : i32
    return %c0_i32, %arg1 : i32, i32
  }
  func.func @transform_3(%arg0: i32, %arg1: i32, %arg2: i32) -> (i32, i32) {
    %c0_i32 = arith.constant 0 : i32
    %c0_i32_0 = arith.constant 0 : i32
    return %c0_i32, %arg1 : i32, i32
  }
  func.func @transform_4(%arg0: i32, %arg1: i32, %arg2: i32) -> (i32, i32) {
    %c0_i32 = arith.constant 0 : i32
    %c0_i32_0 = arith.constant 0 : i32
    return %c0_i32, %arg1 : i32, i32
  }
  func.func @transform_5(%arg0: i32, %arg1: i32, %arg2: i32) -> (i32, i32) {
    %c0_i32 = arith.constant 0 : i32
    return %arg0, %arg1 : i32, i32
  }
}

</mosaic_0001>

<llo_original>
// kernel: tpu_custom_call.1
$region0: #{tpu_custom_call.1}
  #allocation0 [shape = 'u32[]', space=smem, size = 0x4, offset = 0x4, fixed_abs, tag = 'smem constant byte address 0x4 - core index']
  #allocation1 [shape = 'u32[72,128]{1,0:T(1,128)}', space=vmem, size = 0x9000, scoped, tag = 'internal scratch']
  #allocation2 [shape = 'f32[512,128]{1,0:T(8,128)}', space=vmem, size = 0x40000, scoped, tag = 'scratch operand']
  %s0 = inlined_call_operand.hbm [shape: bf16[2048,256], index: 0, kind: input, shape index: {}]
  %s1 = inlined_call_operand.hbm [shape: bf16[256,128], index: 1, kind: input, shape index: {}]
  %s2 = inlined_call_operand.vmem [shape: f32[1,128], index: 2, kind: input, shape index: {}]
  %s3 = inlined_call_operand.vmem [shape: f32[1,128], index: 3, kind: input, shape index: {}]
  %s4 = inlined_call_operand.vmem [shape: f32[1,128], index: 4, kind: input, shape index: {}]
  %s5 = inlined_call_operand.hbm [shape: bf16[2048,128], index: 5, kind: output, shape index: {}]
  %s6 = sld [smem:[#allocation0]]
  $region69: #{tpu_custom_call.1} parent=0
    _
  %s8 = ssub.s32 1, %s6
  %s9 = scalar_select 0, %s8, %s6
  $region1: #{tpu_custom_call.1} parent=0
    #allocation3 [shape = 'u8[524288]{0}', space=vmem, size = 0x80000, scoped, tag = 'input window, operand 0']
    #allocation4 [shape = 's32[2]{0}', space=sflag, size = 0x8, scoped, tag = 'scoped memory for tpu_custom_call.1']
    #allocation5 [shape = 's32[2]{0}', space=sflag, size = 0x8, scoped, tag = 'scoped memory for tpu_custom_call.1']
    #allocation6 [shape = 'u8[65536]{0}', space=vmem, size = 0x10000, scoped, tag = 'input window, operand 1, single buffered']
    #allocation7 [shape = 's32[1]{0}', space=sflag, size = 0x4, scoped, tag = 'scoped memory for tpu_custom_call.1']
    #allocation8 [shape = 'u8[262144]{0}', space=vmem, size = 0x40000, scoped, tag = 'output window, operand 0']
    %10 = vsyncpa [#allocation4], 0
    %s11 = scalar_lea.sflag [#allocation4], 1
    %12 = vsyncpa %s11, 0
    %13 = vsyncpa [#allocation7], 0
    %14 = vsyncpa [#allocation5], 0
    %s15 = scalar_lea.sflag [#allocation5], 1
    %16 = vsyncpa %s15, 0
    loop: start=0, step=1, limit=6
    $region2: #{tpu_custom_call.1} parent=1 // loop_pre_header
      _
    $region3: #{tpu_custom_call.1} parent=1 // loop_header
      %s18 = sphi 0, %s22
      %p19 = scmp.ge.s32.totalorder %s18, 6
      %s25 = sphi 0, %s44
      %s26 = sphi 0, %s40
      %s27 = sphi 0, %s36
      %s28 = sphi 0, %s25
      %s29 = sphi 0, %s26
      %s30 = sphi 0, %s27
      %s31 = sphi 0, %s28
      %s32 = sphi 0, %s29
      %s33 = sphi 0, %s30
      %s49 = sphi 0, %s51
      %s52 = sphi 0, %s49
      %s53 = sphi 0, %s52
      %s69 = sphi 0, %s53
      %s77 = sphi 0, %s79
      %s80 = sphi 0, %s77
      %s81 = sphi 0, %s80
      %s97 = sphi 0, %s81
      %s103 = sphi 0, %s105
      %s106 = sphi 0, %s103
      %s107 = sphi 0, %s106
      %s123 = sphi 0, %s107
      %s129 = sphi 0, %s131
      %s132 = sphi 0, %s129
      %s133 = sphi 0, %s132
      %s149 = sphi 0, %s133
      %s155 = sphi 0, %s157
      %s158 = sphi 0, %s155
      %s159 = sphi 0, %s158
      %s175 = sphi 0, %s159
      %s183 = sphi 0, %s185
      %s186 = sphi 0, %s183
      %s187 = sphi 0, %s186
      %s203 = sphi 0, %s187
    $region4: #{tpu_custom_call.1} parent=1 // loop_header_branch
      %21 = sbr.rel (%p19) target = $region8
    $region5: #{tpu_custom_call.1} parent=1 // loop_body
      %s23 = ssub.s32 %s18, 1
      %s24 = ssub.s32 %s18, 2
      %s34 = sadd.s32 1, %s27
      %p35 = scmp.ge.s32.totalorder %s34, 1
      %s36 = scalar_select %p35, 0, %s34
      %s37 = sadd.s32 1, %s26
      %s38 = scalar_select %p35, %s37, %s26
      %p39 = scmp.ge.s32.totalorder %s38, 1
      %s40 = scalar_select %p39, 0, %s38
      %s41 = sadd.s32 1, %s25
      %s42 = scalar_select %p39, %s41, %s25
      %p43 = scmp.ge.s32.totalorder %s42, 4
      %s44 = scalar_select %p43, 0, %s42
      %s45 = ssub.s32 %s25, %s44
      %s46 = ssub.s32 %s27, %s36
      %s47 = sor.u32 %s45, %s46
      %p48 = scmp.eq.s32.totalorder %s47, 0
      %s50 = sadd.s32 %s49, 1
      %s51 = scalar_select %p48, %s49, %s50
      %p54 = pneg %p48
      %p55 = scmp.eq.s32.totalorder %s18, 3
      %p56 = por %p54, %p55
      %p57 = scmp.ne.s32.totalorder %s49, %s52
      %p58 = scmp.eq.s32.totalorder %s18, 0
      %p59 = por %p57, %p58
      %p60 = scmp.ne.s32.totalorder %s49, %s52
      %p61 = scmp.eq.s32.totalorder %s23, 3
      %p62 = por %p60, %p61
      %p63 = scmp.ne.s32.totalorder %s52, %s53
      %p64 = scmp.eq.s32.totalorder %s23, 0
      %p65 = por %p63, %p64
      %p66 = scmp.ne.s32.totalorder %s52, %s53
      %p67 = scmp.eq.s32.totalorder %s24, 3
      %p68 = por %p66, %p67
      %p70 = scmp.ne.s32.totalorder %s53, %s69
      %p71 = scmp.eq.s32.totalorder %s24, 0
      %p72 = por %p70, %p71
      %s73 = ssub.s32 %s27, %s36
      %s74 = ssub.s32 %s26, %s40
      %s75 = sor.u32 %s73, %s74
      %p76 = scmp.eq.s32.totalorder %s75, 0
      %s78 = sadd.s32 %s77, 1
      %s79 = scalar_select %p76, %s77, %s78
      %p82 = pneg %p76
      %p83 = scmp.eq.s32.totalorder %s18, 3
      %p84 = por %p82, %p83
      %p85 = scmp.ne.s32.totalorder %s77, %s80
      %p86 = scmp.eq.s32.totalorder %s18, 0
      %p87 = por %p85, %p86
      %p88 = scmp.ne.s32.totalorder %s77, %s80
      %p89 = scmp.eq.s32.totalorder %s23, 3
      %p90 = por %p88, %p89
      %p91 = scmp.ne.s32.totalorder %s80, %s81
      %p92 = scmp.eq.s32.totalorder %s23, 0
      %p93 = por %p91, %p92
      %p94 = scmp.ne.s32.totalorder %s80, %s81
      %p95 = scmp.eq.s32.totalorder %s24, 3
      %p96 = por %p94, %p95
      %p98 = scmp.ne.s32.totalorder %s81, %s97
      %p99 = scmp.eq.s32.totalorder %s24, 0
      %p100 = por %p98, %p99
      %s101 = ssub.s32 %s26, %s40
      %p102 = scmp.eq.s32.totalorder %s101, 0
      %s104 = sadd.s32 %s103, 1
      %s105 = scalar_select %p102, %s103, %s104
      %p108 = pneg %p102
      %p109 = scmp.eq.s32.totalorder %s18, 3
      %p110 = por %p108, %p109
      %p111 = scmp.ne.s32.totalorder %s103, %s106
      %p112 = scmp.eq.s32.totalorder %s18, 0
      %p113 = por %p111, %p112
      %p114 = scmp.ne.s32.totalorder %s103, %s106
      %p115 = scmp.eq.s32.totalorder %s23, 3
      %p116 = por %p114, %p115
      %p117 = scmp.ne.s32.totalorder %s106, %s107
      %p118 = scmp.eq.s32.totalorder %s23, 0
      %p119 = por %p117, %p118
      %p120 = scmp.ne.s32.totalorder %s106, %s107
      %p121 = scmp.eq.s32.totalorder %s24, 3
      %p122 = por %p120, %p121
      %p124 = scmp.ne.s32.totalorder %s107, %s123
      %p125 = scmp.eq.s32.totalorder %s24, 0
      %p126 = por %p124, %p125
      %s127 = ssub.s32 %s26, %s40
      %p128 = scmp.eq.s32.totalorder %s127, 0
      %s130 = sadd.s32 %s129, 1
      %s131 = scalar_select %p128, %s129, %s130
      %p134 = pneg %p128
      %p135 = scmp.eq.s32.totalorder %s18, 3
      %p136 = por %p134, %p135
      %p137 = scmp.ne.s32.totalorder %s129, %s132
      %p138 = scmp.eq.s32.totalorder %s18, 0
      %p139 = por %p137, %p138
      %p140 = scmp.ne.s32.totalorder %s129, %s132
      %p141 = scmp.eq.s32.totalorder %s23, 3
      %p142 = por %p140, %p141
      %p143 = scmp.ne.s32.totalorder %s132, %s133
      %p144 = scmp.eq.s32.totalorder %s23, 0
      %p145 = por %p143, %p144
      %p146 = scmp.ne.s32.totalorder %s132, %s133
      %p147 = scmp.eq.s32.totalorder %s24, 3
      %p148 = por %p146, %p147
      %p150 = scmp.ne.s32.totalorder %s133, %s149
      %p151 = scmp.eq.s32.totalorder %s24, 0
      %p152 = por %p150, %p151
      %s153 = ssub.s32 %s26, %s40
      %p154 = scmp.eq.s32.totalorder %s153, 0
      %s156 = sadd.s32 %s155, 1
      %s157 = scalar_select %p154, %s155, %s156
      %p160 = pneg %p154
      %p161 = scmp.eq.s32.totalorder %s18, 3
      %p162 = por %p160, %p161
      %p163 = scmp.ne.s32.totalorder %s155, %s158
      %p164 = scmp.eq.s32.totalorder %s18, 0
      %p165 = por %p163, %p164
      %p166 = scmp.ne.s32.totalorder %s155, %s158
      %p167 = scmp.eq.s32.totalorder %s23, 3
      %p168 = por %p166, %p167
      %p169 = scmp.ne.s32.totalorder %s158, %s159
      %p170 = scmp.eq.s32.totalorder %s23, 0
      %p171 = por %p169, %p170
      %p172 = scmp.ne.s32.totalorder %s158, %s159
      %p173 = scmp.eq.s32.totalorder %s24, 3
      %p174 = por %p172, %p173
      %p176 = scmp.ne.s32.totalorder %s159, %s175
      %p177 = scmp.eq.s32.totalorder %s24, 0
      %p178 = por %p176, %p177
      %s179 = ssub.s32 %s25, %s44
      %s180 = ssub.s32 %s26, %s40
      %s181 = sor.u32 %s179, %s180
      %p182 = scmp.eq.s32.totalorder %s181, 0
      %s184 = sadd.s32 %s183, 1
      %s185 = scalar_select %p182, %s183, %s184
      %p188 = pneg %p182
      %p189 = scmp.eq.s32.totalorder %s18, 3
      %p190 = por %p188, %p189
      %p191 = scmp.ne.s32.totalorder %s183, %s186
      %p192 = scmp.eq.s32.totalorder %s18, 0
      %p193 = por %p191, %p192
      %p194 = scmp.ne.s32.totalorder %s183, %s186
      %p195 = scmp.eq.s32.totalorder %s23, 3
      %p196 = por %p194, %p195
      %p197 = scmp.ne.s32.totalorder %s186, %s187
      %p198 = scmp.eq.s32.totalorder %s23, 0
      %p199 = por %p197, %p198
      %p200 = scmp.ne.s32.totalorder %s186, %s187
      %p201 = scmp.eq.s32.totalorder %s24, 3
      %p202 = por %p200, %p201
      %p204 = scmp.ne.s32.totalorder %s187, %s203
      %p205 = scmp.eq.s32.totalorder %s24, 0
      %p206 = por %p204, %p205
      %p207 = scmp.le.s32.totalorder 1, %s18
      %p208 = scmp.lt.s32.totalorder %s18, 5
      %p209 = pnand %p207, %p208
      %p210 = pneg %p209
      // Predicated region
      $region9: #{tpu_custom_call.1} parent=5 // pred_check
        _
      $region10: #{tpu_custom_call.1} parent=5 // pred_check_branch
        %212 = sbr.rel (%p209) target = $region12
      $region11: #{tpu_custom_call.1} parent=5 // pred_region
        %s213 = ssub.s32 %s18, 1
        // Predicated region
        $region13: #{tpu_custom_call.1} parent=11 // pred_check
          %p214 = pneg %p93
        $region14: #{tpu_custom_call.1} parent=11 // pred_check_branch
          %216 = sbr.rel (%p214) target = $region16
        $region15: #{tpu_custom_call.1} parent=11 // pred_region
          %s217 = smul.u32 32, %s30
          %219 = vsyncadd [#allocation7], 0
          %s220 = sadd.s32 %s29, %s217
          %s221 = smul.addr %s220, 4
          %s222 = scalar_lea.hbm %s1, %s221
          %s223 = sshll.u32 %s222, 4
          %s224 = int_to_ptr.hbm [resolvable:$true] %s223
          %s225 = sshll.u32 [#allocation6], 4
          %s226 = int_to_ptr.vmem [resolvable:$true] %s225
          %231 = dma.hbm_to_vmem [thread:$0]  %s224, 2048, %s226, [#allocation7], 64, 64, 4
        $region16: #{tpu_custom_call.1} parent=11 // pred_fallthru
          _
        // Predicated region
        $region17: #{tpu_custom_call.1} parent=11 // pred_check
          %p232 = pneg %p119
        $region18: #{tpu_custom_call.1} parent=11 // pred_check_branch
          %234 = sbr.rel (%p232) target = $region20
        $region19: #{tpu_custom_call.1} parent=11 // pred_region
          %p235 = scmp.lt.s32.totalorder %s29, 0
          %s236 = scalar_select %p235, %s29, 0
          %s237 = scalar_lea.vmem %s2, %s236
        $region20: #{tpu_custom_call.1} parent=11 // pred_fallthru
          _
        // Predicated region
        $region21: #{tpu_custom_call.1} parent=11 // pred_check
          %p238 = pneg %p145
        $region22: #{tpu_custom_call.1} parent=11 // pred_check_branch
          %240 = sbr.rel (%p238) target = $region24
        $region23: #{tpu_custom_call.1} parent=11 // pred_region
          %p241 = scmp.lt.s32.totalorder %s29, 0
          %s242 = scalar_select %p241, %s29, 0
          %s243 = scalar_lea.vmem %s3, %s242
        $region24: #{tpu_custom_call.1} parent=11 // pred_fallthru
          _
        // Predicated region
        $region25: #{tpu_custom_call.1} parent=11 // pred_check
          %p244 = pneg %p171
        $region26: #{tpu_custom_call.1} parent=11 // pred_check_branch
          %246 = sbr.rel (%p244) target = $region28
        $region27: #{tpu_custom_call.1} parent=11 // pred_region
          %p247 = scmp.lt.s32.totalorder %s29, 0
          %s248 = scalar_select %p247, %s29, 0
          %s249 = scalar_lea.vmem %s4, %s248
        $region28: #{tpu_custom_call.1} parent=11 // pred_fallthru
          _
      $region12: #{tpu_custom_call.1} parent=5 // pred_fallthru
        _
      %p250 = scmp.lt.s32.totalorder %s18, 4
      // Predicated region
      $region29: #{tpu_custom_call.1} parent=5 // pred_check
        %p251 = pneg %p250
      $region30: #{tpu_custom_call.1} parent=5 // pred_check_branch
        %253 = sbr.rel (%p251) target = $region32
      $region31: #{tpu_custom_call.1} parent=5 // pred_region
        // Predicated region
        $region33: #{tpu_custom_call.1} parent=31 // pred_check
          %p254 = pneg %p59
        $region34: #{tpu_custom_call.1} parent=31 // pred_check_branch
          %256 = sbr.rel (%p254) target = $region36
        $region35: #{tpu_custom_call.1} parent=31 // pred_region
          %s257 = sand.u32 %s49, 1
          %s258 = scalar_lea.sflag [#allocation4], %s257
          %s259 = sand.u32 %s49, 1
          %s260 = smul.addr %s259, 512
          %s261 = scalar_lea.vmem [#allocation3], %s260
          %s262 = smul.u32 64, %s25
          %s263 = smul.u32 2, %s27
          %265 = vsyncadd %s258, 0
          %s266 = smul.addr %s262, 2
          %s267 = sadd.s32 %s263, %s266
          %s268 = smul.addr %s267, 4
          %s269 = scalar_lea.hbm %s0, %s268
          %s270 = sshll.u32 %s269, 4
          %s271 = int_to_ptr.hbm [resolvable:$true] %s270
          %s272 = sshll.u32 %s261, 4
          %s273 = int_to_ptr.vmem [resolvable:$true] %s272
          %278 = dma.hbm_to_vmem [thread:$0]  %s271, 8192, %s273, %s258, 128, 128, 8
        $region36: #{tpu_custom_call.1} parent=31 // pred_fallthru
          _
      $region32: #{tpu_custom_call.1} parent=5 // pred_fallthru
        _
      %p279 = scmp.le.s32.totalorder 1, %s18
      %p280 = scmp.lt.s32.totalorder %s18, 5
      %p281 = pnand %p279, %p280
      %p282 = pneg %p281
      // Predicated region
      $region37: #{tpu_custom_call.1} parent=5 // pred_check
        _
      $region38: #{tpu_custom_call.1} parent=5 // pred_check_branch
        %284 = sbr.rel (%p281) target = $region40
      $region39: #{tpu_custom_call.1} parent=5 // pred_region
        %s285 = ssub.s32 %s18, 1
        %s286 = sand.u32 %s52, 1
        %s287 = scalar_lea.sflag [#allocation4], %s286
        %s288 = sand.u32 %s52, 1
        %s289 = smul.addr %s288, 512
        %s290 = scalar_lea.vmem [#allocation3], %s289
        // Predicated region
        $region41: #{tpu_custom_call.1} parent=39 // pred_check
          %p291 = pneg %p65
        $region42: #{tpu_custom_call.1} parent=39 // pred_check_branch
          %293 = sbr.rel (%p291) target = $region44
        $region43: #{tpu_custom_call.1} parent=39 // pred_region
          %295 = dma.done %s287, 8192
        $region44: #{tpu_custom_call.1} parent=39 // pred_fallthru
          _
        // Predicated region
        $region45: #{tpu_custom_call.1} parent=39 // pred_check
          %p296 = pneg %p93
        $region46: #{tpu_custom_call.1} parent=39 // pred_check_branch
          %298 = sbr.rel (%p296) target = $region48
        $region47: #{tpu_custom_call.1} parent=39 // pred_region
          %300 = dma.done [#allocation7], 2048
        $region48: #{tpu_custom_call.1} parent=39 // pred_fallthru
          _
        %s301 = sand.u32 %s52, 1
        %s302 = scalar_lea.sflag [#allocation4], %s301
        %s303 = sand.u32 %s52, 1
        %s304 = smul.addr %s303, 512
        %s305 = scalar_lea.vmem [#allocation3], %s304
        %p306 = pneg %p65
        %p307 = pneg %p62
        %p308 = pneg %p93
        %p309 = pneg %p90
        %p310 = scmp.lt.s32.totalorder %s29, 0
        %s311 = scalar_select %p310, %s29, 0
        %s312 = scalar_lea.vmem %s2, %s311
        %p313 = pneg %p119
        %p314 = pneg %p116
        %p315 = scmp.lt.s32.totalorder %s29, 0
        %s316 = scalar_select %p315, %s29, 0
        %s317 = scalar_lea.vmem %s3, %s316
        %p318 = pneg %p145
        %p319 = pneg %p142
        %p320 = scmp.lt.s32.totalorder %s29, 0
        %s321 = scalar_select %p320, %s29, 0
        %s322 = scalar_lea.vmem %s4, %s321
        %p323 = pneg %p171
        %p324 = pneg %p168
        %p325 = pneg %p199
        %p326 = pneg %p196
        %s327 = sand.u32 %s186, 1
        %s328 = scalar_lea.sflag [#allocation5], %s327
        %s329 = sand.u32 %s186, 1
        %s330 = smul.addr %s329, 256
        %s331 = scalar_lea.vmem [#allocation8], %s330
        %s332 = smul.u32 64, %s28
        %s333 = smul.u32 2, %s30
        %s334 = smul.u32 32, %s30
        %p335 = scmp.lt.s32.totalorder %s29, 0
        %s336 = scalar_select %p335, %s29, 0
        %s337 = scalar_lea.vmem %s2, %s336
        %p338 = scmp.lt.s32.totalorder %s29, 0
        %s339 = scalar_select %p338, %s29, 0
        %s340 = scalar_lea.vmem %s3, %s339
        %p341 = scmp.lt.s32.totalorder %s29, 0
        %s342 = scalar_select %p341, %s29, 0
        %s343 = scalar_lea.vmem %s4, %s342
        %s344 = smul.u32 64, %s28
        %p345 = scmp.eq.s32.totalorder %s30, 0
        // Predicated region
        $region49: #{tpu_custom_call.1} parent=39 // pred_check
          %p346 = pneg %p345
        $region50: #{tpu_custom_call.1} parent=39 // pred_check_branch
          %348 = sbr.rel (%p346) target = $region52
        $region51: #{tpu_custom_call.1} parent=39 // pred_region
          %349 = vst [vmem:[#allocation2] sm:$0xff] 0.0
          %350 = vst [vmem:[#allocation2 + $0x8] sm:$0xff] 0.0
          %351 = vst [vmem:[#allocation2 + $0x10] sm:$0xff] 0.0
          %352 = vst [vmem:[#allocation2 + $0x18] sm:$0xff] 0.0
          %353 = vst [vmem:[#allocation2 + $0x20] sm:$0xff] 0.0
          %354 = vst [vmem:[#allocation2 + $0x28] sm:$0xff] 0.0
          %355 = vst [vmem:[#allocation2 + $0x30] sm:$0xff] 0.0
          %356 = vst [vmem:[#allocation2 + $0x38] sm:$0xff] 0.0
          %357 = vst [vmem:[#allocation2 + $0x40] sm:$0xff] 0.0
          %358 = vst [vmem:[#allocation2 + $0x48] sm:$0xff] 0.0
          %359 = vst [vmem:[#allocation2 + $0x50] sm:$0xff] 0.0
          %360 = vst [vmem:[#allocation2 + $0x58] sm:$0xff] 0.0
          %361 = vst [vmem:[#allocation2 + $0x60] sm:$0xff] 0.0
          %362 = vst [vmem:[#allocation2 + $0x68] sm:$0xff] 0.0
          %363 = vst [vmem:[#allocation2 + $0x70] sm:$0xff] 0.0
          %364 = vst [vmem:[#allocation2 + $0x78] sm:$0xff] 0.0
          %365 = vst [vmem:[#allocation2 + $0x80] sm:$0xff] 0.0
          %366 = vst [vmem:[#allocation2 + $0x88] sm:$0xff] 0.0
          %367 = vst [vmem:[#allocation2 + $0x90] sm:$0xff] 0.0
          %368 = vst [vmem:[#allocation2 + $0x98] sm:$0xff] 0.0
          %369 = vst [vmem:[#allocation2 + $0xa0] sm:$0xff] 0.0
          %370 = vst [vmem:[#allocation2 + $0xa8] sm:$0xff] 0.0
          %371 = vst [vmem:[#allocation2 + $0xb0] sm:$0xff] 0.0
          %372 = vst [vmem:[#allocation2 + $0xb8] sm:$0xff] 0.0
          %373 = vst [vmem:[#allocation2 + $0xc0] sm:$0xff] 0.0
          %374 = vst [vmem:[#allocation2 + $0xc8] sm:$0xff] 0.0
          %375 = vst [vmem:[#allocation2 + $0xd0] sm:$0xff] 0.0
          %376 = vst [vmem:[#allocation2 + $0xd8] sm:$0xff] 0.0
          %377 = vst [vmem:[#allocation2 + $0xe0] sm:$0xff] 0.0
          %378 = vst [vmem:[#allocation2 + $0xe8] sm:$0xff] 0.0
          %379 = vst [vmem:[#allocation2 + $0xf0] sm:$0xff] 0.0
          %380 = vst [vmem:[#allocation2 + $0xf8] sm:$0xff] 0.0
          %381 = vst [vmem:[#allocation2 + $0x100] sm:$0xff] 0.0
          %382 = vst [vmem:[#allocation2 + $0x108] sm:$0xff] 0.0
          %383 = vst [vmem:[#allocation2 + $0x110] sm:$0xff] 0.0
          %384 = vst [vmem:[#allocation2 + $0x118] sm:$0xff] 0.0
          %385 = vst [vmem:[#allocation2 + $0x120] sm:$0xff] 0.0
          %386 = vst [vmem:[#allocation2 + $0x128] sm:$0xff] 0.0
          %387 = vst [vmem:[#allocation2 + $0x130] sm:$0xff] 0.0
          %388 = vst [vmem:[#allocation2 + $0x138] sm:$0xff] 0.0
          %389 = vst [vmem:[#allocation2 + $0x140] sm:$0xff] 0.0
          %390 = vst [vmem:[#allocation2 + $0x148] sm:$0xff] 0.0
          %391 = vst [vmem:[#allocation2 + $0x150] sm:$0xff] 0.0
          %392 = vst [vmem:[#allocation2 + $0x158] sm:$0xff] 0.0
          %393 = vst [vmem:[#allocation2 + $0x160] sm:$0xff] 0.0
          %394 = vst [vmem:[#allocation2 + $0x168] sm:$0xff] 0.0
          %395 = vst [vmem:[#allocation2 + $0x170] sm:$0xff] 0.0
          %396 = vst [vmem:[#allocation2 + $0x178] sm:$0xff] 0.0
          %397 = vst [vmem:[#allocation2 + $0x180] sm:$0xff] 0.0
          %398 = vst [vmem:[#allocation2 + $0x188] sm:$0xff] 0.0
          %399 = vst [vmem:[#allocation2 + $0x190] sm:$0xff] 0.0
          %400 = vst [vmem:[#allocation2 + $0x198] sm:$0xff] 0.0
          %401 = vst [vmem:[#allocation2 + $0x1a0] sm:$0xff] 0.0
          %402 = vst [vmem:[#allocation2 + $0x1a8] sm:$0xff] 0.0
          %403 = vst [vmem:[#allocation2 + $0x1b0] sm:$0xff] 0.0
          %404 = vst [vmem:[#allocation2 + $0x1b8] sm:$0xff] 0.0
          %405 = vst [vmem:[#allocation2 + $0x1c0] sm:$0xff] 0.0
          %406 = vst [vmem:[#allocation2 + $0x1c8] sm:$0xff] 0.0
          %407 = vst [vmem:[#allocation2 + $0x1d0] sm:$0xff] 0.0
          %408 = vst [vmem:[#allocation2 + $0x1d8] sm:$0xff] 0.0
          %409 = vst [vmem:[#allocation2 + $0x1e0] sm:$0xff] 0.0
          %410 = vst [vmem:[#allocation2 + $0x1e8] sm:$0xff] 0.0
          %411 = vst [vmem:[#allocation2 + $0x1f0] sm:$0xff] 0.0
          %412 = vst [vmem:[#allocation2 + $0x1f8] sm:$0xff] 0.0
        $region52: #{tpu_custom_call.1} parent=39 // pred_fallthru
          _
        %v413 = vld [vmem:[#allocation2] sm:$0xff]
        %v414 = vld [vmem:[#allocation2 + $0x8] sm:$0xff]
        %v415 = vld [vmem:[#allocation2 + $0x10] sm:$0xff]
        %v416 = vld [vmem:[#allocation2 + $0x18] sm:$0xff]
        %v417 = vld [vmem:[#allocation2 + $0x20] sm:$0xff]
        %v418 = vld [vmem:[#allocation2 + $0x28] sm:$0xff]
        %v419 = vld [vmem:[#allocation2 + $0x30] sm:$0xff]
        %v420 = vld [vmem:[#allocation2 + $0x38] sm:$0xff]
        %v421 = vld [vmem:[#allocation2 + $0x40] sm:$0xff]
        %v422 = vld [vmem:[#allocation2 + $0x48] sm:$0xff]
        %v423 = vld [vmem:[#allocation2 + $0x50] sm:$0xff]
        %v424 = vld [vmem:[#allocation2 + $0x58] sm:$0xff]
        %v425 = vld [vmem:[#allocation2 + $0x60] sm:$0xff]
        %v426 = vld [vmem:[#allocation2 + $0x68] sm:$0xff]
        %v427 = vld [vmem:[#allocation2 + $0x70] sm:$0xff]
        %v428 = vld [vmem:[#allocation2 + $0x78] sm:$0xff]
        %v429 = vld [vmem:[#allocation2 + $0x80] sm:$0xff]
        %v430 = vld [vmem:[#allocation2 + $0x88] sm:$0xff]
        %v431 = vld [vmem:[#allocation2 + $0x90] sm:$0xff]
        %v432 = vld [vmem:[#allocation2 + $0x98] sm:$0xff]
        %v433 = vld [vmem:[#allocation2 + $0xa0] sm:$0xff]
        %v434 = vld [vmem:[#allocation2 + $0xa8] sm:$0xff]
        %v435 = vld [vmem:[#allocation2 + $0xb0] sm:$0xff]
        %v436 = vld [vmem:[#allocation2 + $0xb8] sm:$0xff]
        %v437 = vld [vmem:[#allocation2 + $0xc0] sm:$0xff]
        %v438 = vld [vmem:[#allocation2 + $0xc8] sm:$0xff]
        %v439 = vld [vmem:[#allocation2 + $0xd0] sm:$0xff]
        %v440 = vld [vmem:[#allocation2 + $0xd8] sm:$0xff]
        %v441 = vld [vmem:[#allocation2 + $0xe0] sm:$0xff]
        %v442 = vld [vmem:[#allocation2 + $0xe8] sm:$0xff]
        %v443 = vld [vmem:[#allocation2 + $0xf0] sm:$0xff]
        %v444 = vld [vmem:[#allocation2 + $0xf8] sm:$0xff]
        %v445 = vld [vmem:[#allocation2 + $0x100] sm:$0xff]
        %v446 = vld [vmem:[#allocation2 + $0x108] sm:$0xff]
        %v447 = vld [vmem:[#allocation2 + $0x110] sm:$0xff]
        %v448 = vld [vmem:[#allocation2 + $0x118] sm:$0xff]
        %v449 = vld [vmem:[#allocation2 + $0x120] sm:$0xff]
        %v450 = vld [vmem:[#allocation2 + $0x128] sm:$0xff]
        %v451 = vld [vmem:[#allocation2 + $0x130] sm:$0xff]
        %v452 = vld [vmem:[#allocation2 + $0x138] sm:$0xff]
        %v453 = vld [vmem:[#allocation2 + $0x140] sm:$0xff]
        %v454 = vld [vmem:[#allocation2 + $0x148] sm:$0xff]
        %v455 = vld [vmem:[#allocation2 + $0x150] sm:$0xff]
        %v456 = vld [vmem:[#allocation2 + $0x158] sm:$0xff]
        %v457 = vld [vmem:[#allocation2 + $0x160] sm:$0xff]
        %v458 = vld [vmem:[#allocation2 + $0x168] sm:$0xff]
        %v459 = vld [vmem:[#allocation2 + $0x170] sm:$0xff]
        %v460 = vld [vmem:[#allocation2 + $0x178] sm:$0xff]
        %v461 = vld [vmem:[#allocation2 + $0x180] sm:$0xff]
        %v462 = vld [vmem:[#allocation2 + $0x188] sm:$0xff]
        %v463 = vld [vmem:[#allocation2 + $0x190] sm:$0xff]
        %v464 = vld [vmem:[#allocation2 + $0x198] sm:$0xff]
        %v465 = vld [vmem:[#allocation2 + $0x1a0] sm:$0xff]
        %v466 = vld [vmem:[#allocation2 + $0x1a8] sm:$0xff]
        %v467 = vld [vmem:[#allocation2 + $0x1b0] sm:$0xff]
        %v468 = vld [vmem:[#allocation2 + $0x1b8] sm:$0xff]
        %v469 = vld [vmem:[#allocation2 + $0x1c0] sm:$0xff]
        %v470 = vld [vmem:[#allocation2 + $0x1c8] sm:$0xff]
        %v471 = vld [vmem:[#allocation2 + $0x1d0] sm:$0xff]
        %v472 = vld [vmem:[#allocation2 + $0x1d8] sm:$0xff]
        %v473 = vld [vmem:[#allocation2 + $0x1e0] sm:$0xff]
        %v474 = vld [vmem:[#allocation2 + $0x1e8] sm:$0xff]
        %v475 = vld [vmem:[#allocation2 + $0x1f0] sm:$0xff]
        %v476 = vld [vmem:[#allocation2 + $0x1f8] sm:$0xff]
        %v477 = vld [vmem:[%s290] sm:$0xff]
        %v478 = vld [vmem:[%s290 + $0x8] sm:$0xff]
        %v479 = vld [vmem:[%s290 + $0x10] sm:$0xff]
        %v480 = vld [vmem:[%s290 + $0x18] sm:$0xff]
        %v481 = vld [vmem:[%s290 + $0x20] sm:$0xff]
        %v482 = vld [vmem:[%s290 + $0x28] sm:$0xff]
        %v483 = vld [vmem:[%s290 + $0x30] sm:$0xff]
        %v484 = vld [vmem:[%s290 + $0x38] sm:$0xff]
        %v485 = vld [vmem:[%s290 + $0x40] sm:$0xff]
        %v486 = vld [vmem:[%s290 + $0x48] sm:$0xff]
        %v487 = vld [vmem:[%s290 + $0x50] sm:$0xff]
        %v488 = vld [vmem:[%s290 + $0x58] sm:$0xff]
        %v489 = vld [vmem:[%s290 + $0x60] sm:$0xff]
        %v490 = vld [vmem:[%s290 + $0x68] sm:$0xff]
        %v491 = vld [vmem:[%s290 + $0x70] sm:$0xff]
        %v492 = vld [vmem:[%s290 + $0x78] sm:$0xff]
        %v493 = vld [vmem:[%s290 + $0x80] sm:$0xff]
        %v494 = vld [vmem:[%s290 + $0x88] sm:$0xff]
        %v495 = vld [vmem:[%s290 + $0x90] sm:$0xff]
        %v496 = vld [vmem:[%s290 + $0x98] sm:$0xff]
        %v497 = vld [vmem:[%s290 + $0xa0] sm:$0xff]
        %v498 = vld [vmem:[%s290 + $0xa8] sm:$0xff]
        %v499 = vld [vmem:[%s290 + $0xb0] sm:$0xff]
        %v500 = vld [vmem:[%s290 + $0xb8] sm:$0xff]
        %v501 = vld [vmem:[%s290 + $0xc0] sm:$0xff]
        %v502 = vld [vmem:[%s290 + $0xc8] sm:$0xff]
        %v503 = vld [vmem:[%s290 + $0xd0] sm:$0xff]
        %v504 = vld [vmem:[%s290 + $0xd8] sm:$0xff]
        %v505 = vld [vmem:[%s290 + $0xe0] sm:$0xff]
        %v506 = vld [vmem:[%s290 + $0xe8] sm:$0xff]
        %v507 = vld [vmem:[%s290 + $0xf0] sm:$0xff]
        %v508 = vld [vmem:[%s290 + $0xf8] sm:$0xff]
        %v509 = vld [vmem:[%s290 + $0x100] sm:$0xff]
        %v510 = vld [vmem:[%s290 + $0x108] sm:$0xff]
        %v511 = vld [vmem:[%s290 + $0x110] sm:$0xff]
        %v512 = vld [vmem:[%s290 + $0x118] sm:$0xff]
        %v513 = vld [vmem:[%s290 + $0x120] sm:$0xff]
        %v514 = vld [vmem:[%s290 + $0x128] sm:$0xff]
        %v515 = vld [vmem:[%s290 + $0x130] sm:$0xff]
        %v516 = vld [vmem:[%s290 + $0x138] sm:$0xff]
        %v517 = vld [vmem:[%s290 + $0x140] sm:$0xff]
        %v518 = vld [vmem:[%s290 + $0x148] sm:$0xff]
        %v519 = vld [vmem:[%s290 + $0x150] sm:$0xff]
        %v520 = vld [vmem:[%s290 + $0x158] sm:$0xff]
        %v521 = vld [vmem:[%s290 + $0x160] sm:$0xff]
        %v522 = vld [vmem:[%s290 + $0x168] sm:$0xff]
        %v523 = vld [vmem:[%s290 + $0x170] sm:$0xff]
        %v524 = vld [vmem:[%s290 + $0x178] sm:$0xff]
        %v525 = vld [vmem:[%s290 + $0x180] sm:$0xff]
        %v526 = vld [vmem:[%s290 + $0x188] sm:$0xff]
        %v527 = vld [vmem:[%s290 + $0x190] sm:$0xff]
        %v528 = vld [vmem:[%s290 + $0x198] sm:$0xff]
        %v529 = vld [vmem:[%s290 + $0x1a0] sm:$0xff]
        %v530 = vld [vmem:[%s290 + $0x1a8] sm:$0xff]
        %v531 = vld [vmem:[%s290 + $0x1b0] sm:$0xff]
        %v532 = vld [vmem:[%s290 + $0x1b8] sm:$0xff]
        %v533 = vld [vmem:[%s290 + $0x1c0] sm:$0xff]
        %v534 = vld [vmem:[%s290 + $0x1c8] sm:$0xff]
        %v535 = vld [vmem:[%s290 + $0x1d0] sm:$0xff]
        %v536 = vld [vmem:[%s290 + $0x1d8] sm:$0xff]
        %v537 = vld [vmem:[%s290 + $0x1e0] sm:$0xff]
        %v538 = vld [vmem:[%s290 + $0x1e8] sm:$0xff]
        %v539 = vld [vmem:[%s290 + $0x1f0] sm:$0xff]
        %v540 = vld [vmem:[%s290 + $0x1f8] sm:$0xff]
        %v541 = vld [vmem:[#allocation6] sm:$0xf]
        %v542 = vld [vmem:[#allocation6 + $0x4] sm:$0xf]
        %v543 = vld [vmem:[#allocation6 + $0x8] sm:$0xf]
        %v544 = vld [vmem:[#allocation6 + $0xc] sm:$0xf]
        %v545 = vld [vmem:[#allocation6 + $0x10] sm:$0xf]
        %v546 = vld [vmem:[#allocation6 + $0x14] sm:$0xf]
        %v547 = vld [vmem:[#allocation6 + $0x18] sm:$0xf]
        %v548 = vld [vmem:[#allocation6 + $0x1c] sm:$0xf]
        %v549 = vld [vmem:[#allocation6 + $0x20] sm:$0xf]
        %v550 = vld [vmem:[#allocation6 + $0x24] sm:$0xf]
        %v551 = vld [vmem:[#allocation6 + $0x28] sm:$0xf]
        %v552 = vld [vmem:[#allocation6 + $0x2c] sm:$0xf]
        %v553 = vld [vmem:[#allocation6 + $0x30] sm:$0xf]
        %v554 = vld [vmem:[#allocation6 + $0x34] sm:$0xf]
        %v555 = vld [vmem:[#allocation6 + $0x38] sm:$0xf]
        %v556 = vld [vmem:[#allocation6 + $0x3c] sm:$0xf]
        %v557 = vld [vmem:[#allocation6 + $0x40] sm:$0xf]
        %v558 = vld [vmem:[#allocation6 + $0x44] sm:$0xf]
        %v559 = vld [vmem:[#allocation6 + $0x48] sm:$0xf]
        %v560 = vld [vmem:[#allocation6 + $0x4c] sm:$0xf]
        %v561 = vld [vmem:[#allocation6 + $0x50] sm:$0xf]
        %v562 = vld [vmem:[#allocation6 + $0x54] sm:$0xf]
        %v563 = vld [vmem:[#allocation6 + $0x58] sm:$0xf]
        %v564 = vld [vmem:[#allocation6 + $0x5c] sm:$0xf]
        %v565 = vld [vmem:[#allocation6 + $0x60] sm:$0xf]
        %v566 = vld [vmem:[#allocation6 + $0x64] sm:$0xf]
        %v567 = vld [vmem:[#allocation6 + $0x68] sm:$0xf]
        %v568 = vld [vmem:[#allocation6 + $0x6c] sm:$0xf]
        %v569 = vld [vmem:[#allocation6 + $0x70] sm:$0xf]
        %v570 = vld [vmem:[#allocation6 + $0x74] sm:$0xf]
        %v571 = vld [vmem:[#allocation6 + $0x78] sm:$0xf]
        %v572 = vld [vmem:[#allocation6 + $0x7c] sm:$0xf]
        %v637 = vunpack.c.l.b16 %v477
        %v638 = vunpack.c.h.b16 %v477
        %v639 = vunpack.c.l.b16 %v478
        %v640 = vunpack.c.h.b16 %v478
        %v641 = vunpack.c.l.b16 %v479
        %v642 = vunpack.c.h.b16 %v479
        %v643 = vunpack.c.l.b16 %v480
        %v644 = vunpack.c.h.b16 %v480
        %v645 = vunpack.c.l.b16 %v481
        %v646 = vunpack.c.h.b16 %v481
        %v647 = vunpack.c.l.b16 %v482
        %v648 = vunpack.c.h.b16 %v482
        %v649 = vunpack.c.l.b16 %v483
        %v650 = vunpack.c.h.b16 %v483
        %v651 = vunpack.c.l.b16 %v484
        %v652 = vunpack.c.h.b16 %v484
        %v653 = vunpack.c.l.b16 %v485
        %v654 = vunpack.c.h.b16 %v485
        %v655 = vunpack.c.l.b16 %v486
        %v656 = vunpack.c.h.b16 %v486
        %v657 = vunpack.c.l.b16 %v487
        %v658 = vunpack.c.h.b16 %v487
        %v659 = vunpack.c.l.b16 %v488
        %v660 = vunpack.c.h.b16 %v488
        %v661 = vunpack.c.l.b16 %v489
        %v662 = vunpack.c.h.b16 %v489
        %v663 = vunpack.c.l.b16 %v490
        %v664 = vunpack.c.h.b16 %v490
        %v665 = vunpack.c.l.b16 %v491
        %v666 = vunpack.c.h.b16 %v491
        %v667 = vunpack.c.l.b16 %v492
        %v668 = vunpack.c.h.b16 %v492
        %v669 = vunpack.c.l.b16 %v493
        %v670 = vunpack.c.h.b16 %v493
        %v671 = vunpack.c.l.b16 %v494
        %v672 = vunpack.c.h.b16 %v494
        %v673 = vunpack.c.l.b16 %v495
        %v674 = vunpack.c.h.b16 %v495
        %v675 = vunpack.c.l.b16 %v496
        %v676 = vunpack.c.h.b16 %v496
        %v677 = vunpack.c.l.b16 %v497
        %v678 = vunpack.c.h.b16 %v497
        %v679 = vunpack.c.l.b16 %v498
        %v680 = vunpack.c.h.b16 %v498
        %v681 = vunpack.c.l.b16 %v499
        %v682 = vunpack.c.h.b16 %v499
        %v683 = vunpack.c.l.b16 %v500
        %v684 = vunpack.c.h.b16 %v500
        %v685 = vunpack.c.l.b16 %v501
        %v686 = vunpack.c.h.b16 %v501
        %v687 = vunpack.c.l.b16 %v502
        %v688 = vunpack.c.h.b16 %v502
        %v689 = vunpack.c.l.b16 %v503
        %v690 = vunpack.c.h.b16 %v503
        %v691 = vunpack.c.l.b16 %v504
        %v692 = vunpack.c.h.b16 %v504
        %v693 = vunpack.c.l.b16 %v505
        %v694 = vunpack.c.h.b16 %v505
        %v695 = vunpack.c.l.b16 %v506
        %v696 = vunpack.c.h.b16 %v506
        %v697 = vunpack.c.l.b16 %v507
        %v698 = vunpack.c.h.b16 %v507
        %v699 = vunpack.c.l.b16 %v508
        %v700 = vunpack.c.h.b16 %v508
        %v701 = vunpack.c.l.b16 %v509
        %v702 = vunpack.c.h.b16 %v509
        %v703 = vunpack.c.l.b16 %v510
        %v704 = vunpack.c.h.b16 %v510
        %v705 = vunpack.c.l.b16 %v511
        %v706 = vunpack.c.h.b16 %v511
        %v707 = vunpack.c.l.b16 %v512
        %v708 = vunpack.c.h.b16 %v512
        %v709 = vunpack.c.l.b16 %v513
        %v710 = vunpack.c.h.b16 %v513
        %v711 = vunpack.c.l.b16 %v514
        %v712 = vunpack.c.h.b16 %v514
        %v713 = vunpack.c.l.b16 %v515
        %v714 = vunpack.c.h.b16 %v515
        %v715 = vunpack.c.l.b16 %v516
        %v716 = vunpack.c.h.b16 %v516
        %v717 = vunpack.c.l.b16 %v517
        %v718 = vunpack.c.h.b16 %v517
        %v719 = vunpack.c.l.b16 %v518
        %v720 = vunpack.c.h.b16 %v518
        %v721 = vunpack.c.l.b16 %v519
        %v722 = vunpack.c.h.b16 %v519
        %v723 = vunpack.c.l.b16 %v520
        %v724 = vunpack.c.h.b16 %v520
        %v725 = vunpack.c.l.b16 %v521
        %v726 = vunpack.c.h.b16 %v521
        %v727 = vunpack.c.l.b16 %v522
        %v728 = vunpack.c.h.b16 %v522
        %v729 = vunpack.c.l.b16 %v523
        %v730 = vunpack.c.h.b16 %v523
        %v731 = vunpack.c.l.b16 %v524
        %v732 = vunpack.c.h.b16 %v524
        %v733 = vunpack.c.l.b16 %v525
        %v734 = vunpack.c.h.b16 %v525
        %v735 = vunpack.c.l.b16 %v526
        %v736 = vunpack.c.h.b16 %v526
        %v737 = vunpack.c.l.b16 %v527
        %v738 = vunpack.c.h.b16 %v527
        %v739 = vunpack.c.l.b16 %v528
        %v740 = vunpack.c.h.b16 %v528
        %v741 = vunpack.c.l.b16 %v529
        %v742 = vunpack.c.h.b16 %v529
        %v743 = vunpack.c.l.b16 %v530
        %v744 = vunpack.c.h.b16 %v530
        %v745 = vunpack.c.l.b16 %v531
        %v746 = vunpack.c.h.b16 %v531
        %v747 = vunpack.c.l.b16 %v532
        %v748 = vunpack.c.h.b16 %v532
        %v749 = vunpack.c.l.b16 %v533
        %v750 = vunpack.c.h.b16 %v533
        %v751 = vunpack.c.l.b16 %v534
        %v752 = vunpack.c.h.b16 %v534
        %v753 = vunpack.c.l.b16 %v535
        %v754 = vunpack.c.h.b16 %v535
        %v755 = vunpack.c.l.b16 %v536
        %v756 = vunpack.c.h.b16 %v536
        %v757 = vunpack.c.l.b16 %v537
        %v758 = vunpack.c.h.b16 %v537
        %v759 = vunpack.c.l.b16 %v538
        %v760 = vunpack.c.h.b16 %v538
        %v761 = vunpack.c.l.b16 %v539
        %v762 = vunpack.c.h.b16 %v539
        %v763 = vunpack.c.l.b16 %v540
        %v764 = vunpack.c.h.b16 %v540
        %v765 = vpack.c.b16 %v639, %v637
        %v766 = vpack.c.b16 %v640, %v638
        %v767 = vpack.c.b16 %v643, %v641
        %v768 = vpack.c.b16 %v644, %v642
        %v769 = vpack.c.b16 %v647, %v645
        %v770 = vpack.c.b16 %v648, %v646
        %v771 = vpack.c.b16 %v651, %v649
        %v772 = vpack.c.b16 %v652, %v650
        %v773 = vpack.c.b16 %v655, %v653
        %v774 = vpack.c.b16 %v656, %v654
        %v775 = vpack.c.b16 %v659, %v657
        %v776 = vpack.c.b16 %v660, %v658
        %v777 = vpack.c.b16 %v663, %v661
        %v778 = vpack.c.b16 %v664, %v662
        %v779 = vpack.c.b16 %v667, %v665
        %v780 = vpack.c.b16 %v668, %v666
        %v781 = vpack.c.b16 %v671, %v669
        %v782 = vpack.c.b16 %v672, %v670
        %v783 = vpack.c.b16 %v675, %v673
        %v784 = vpack.c.b16 %v676, %v674
        %v785 = vpack.c.b16 %v679, %v677
        %v786 = vpack.c.b16 %v680, %v678
        %v787 = vpack.c.b16 %v683, %v681
        %v788 = vpack.c.b16 %v684, %v682
        %v789 = vpack.c.b16 %v687, %v685
        %v790 = vpack.c.b16 %v688, %v686
        %v791 = vpack.c.b16 %v691, %v689
        %v792 = vpack.c.b16 %v692, %v690
        %v793 = vpack.c.b16 %v695, %v693
        %v794 = vpack.c.b16 %v696, %v694
        %v795 = vpack.c.b16 %v699, %v697
        %v796 = vpack.c.b16 %v700, %v698
        %v797 = vpack.c.b16 %v703, %v701
        %v798 = vpack.c.b16 %v704, %v702
        %v799 = vpack.c.b16 %v707, %v705
        %v800 = vpack.c.b16 %v708, %v706
        %v801 = vpack.c.b16 %v711, %v709
        %v802 = vpack.c.b16 %v712, %v710
        %v803 = vpack.c.b16 %v715, %v713
        %v804 = vpack.c.b16 %v716, %v714
        %v805 = vpack.c.b16 %v719, %v717
        %v806 = vpack.c.b16 %v720, %v718
        %v807 = vpack.c.b16 %v723, %v721
        %v808 = vpack.c.b16 %v724, %v722
        %v809 = vpack.c.b16 %v727, %v725
        %v810 = vpack.c.b16 %v728, %v726
        %v811 = vpack.c.b16 %v731, %v729
        %v812 = vpack.c.b16 %v732, %v730
        %v813 = vpack.c.b16 %v735, %v733
        %v814 = vpack.c.b16 %v736, %v734
        %v815 = vpack.c.b16 %v739, %v737
        %v816 = vpack.c.b16 %v740, %v738
        %v817 = vpack.c.b16 %v743, %v741
        %v818 = vpack.c.b16 %v744, %v742
        %v819 = vpack.c.b16 %v747, %v745
        %v820 = vpack.c.b16 %v748, %v746
        %v821 = vpack.c.b16 %v751, %v749
        %v822 = vpack.c.b16 %v752, %v750
        %v823 = vpack.c.b16 %v755, %v753
        %v824 = vpack.c.b16 %v756, %v754
        %v825 = vpack.c.b16 %v759, %v757
        %v826 = vpack.c.b16 %v760, %v758
        %v827 = vpack.c.b16 %v763, %v761
        %v828 = vpack.c.b16 %v764, %v762
        %v925 = vunpack.c.l.b16 %v541
        %v926 = vunpack.c.l.b16 %v542
        %v927 = vunpack.c.l.b16 %v543
        %v928 = vunpack.c.l.b16 %v544
        %v929 = vunpack.c.l.b16 %v545
        %v930 = vunpack.c.l.b16 %v546
        %v931 = vunpack.c.l.b16 %v547
        %v932 = vunpack.c.l.b16 %v548
        %v933 = vunpack.c.l.b16 %v549
        %v934 = vunpack.c.l.b16 %v550
        %v935 = vunpack.c.l.b16 %v551
        %v936 = vunpack.c.l.b16 %v552
        %v937 = vunpack.c.l.b16 %v553
        %v938 = vunpack.c.l.b16 %v554
        %v939 = vunpack.c.l.b16 %v555
        %v940 = vunpack.c.l.b16 %v556
        %v941 = vunpack.c.l.b16 %v557
        %v942 = vunpack.c.l.b16 %v558
        %v943 = vunpack.c.l.b16 %v559
        %v944 = vunpack.c.l.b16 %v560
        %v945 = vunpack.c.l.b16 %v561
        %v946 = vunpack.c.l.b16 %v562
        %v947 = vunpack.c.l.b16 %v563
        %v948 = vunpack.c.l.b16 %v564
        %v949 = vunpack.c.l.b16 %v565
        %v950 = vunpack.c.l.b16 %v566
        %v951 = vunpack.c.l.b16 %v567
        %v952 = vunpack.c.l.b16 %v568
        %v953 = vunpack.c.l.b16 %v569
        %v954 = vunpack.c.l.b16 %v570
        %v955 = vunpack.c.l.b16 %v571
        %v956 = vunpack.c.l.b16 %v572
        %v957 = vpack.c.b16 %v926, %v925
        %v958 = vpack.c.b16 %v928, %v927
        %v959 = vpack.c.b16 %v930, %v929
        %v960 = vpack.c.b16 %v932, %v931
        %v961 = vpack.c.b16 %v934, %v933
        %v962 = vpack.c.b16 %v936, %v935
        %v963 = vpack.c.b16 %v938, %v937
        %v964 = vpack.c.b16 %v940, %v939
        %v965 = vpack.c.b16 %v942, %v941
        %v966 = vpack.c.b16 %v944, %v943
        %v967 = vpack.c.b16 %v946, %v945
        %v968 = vpack.c.b16 %v948, %v947
        %v969 = vpack.c.b16 %v950, %v949
        %v970 = vpack.c.b16 %v952, %v951
        %v971 = vpack.c.b16 %v954, %v953
        %v972 = vpack.c.b16 %v956, %v955
        %989 = vmatpush.bf16.msra.mxu0 %v964
        %990 = vmatpush.bf16.msra.mxu0 %v963
        %991 = vmatpush.bf16.msra.mxu0 %v962
        %992 = vmatpush.bf16.msra.mxu0 %v961
        %993 = vmatpush.bf16.msra.mxu0 %v960
        %994 = vmatpush.bf16.msra.mxu0 %v959
        %995 = vmatpush.bf16.msra.mxu0 %v958
        %996 = vmatpush.bf16.msra.mxu0 %v957
        %997 = vmatmul.bf16.gmra.mxu0 %v765
        %v998 = vpop.f32.mrf.mxu0
        %v999 = vadd.f32 0.0, %v998
        %v1000 = vpop.f32.mrf.mxu0
        %v1001 = vadd.f32 0.0, %v1000
        %1002 = vmatmul.bf16.gmra.mxu0 %v767
        %v1003 = vpop.f32.mrf.mxu0
        %v1004 = vadd.f32 0.0, %v1003
        %v1005 = vpop.f32.mrf.mxu0
        %v1006 = vadd.f32 0.0, %v1005
        %1007 = vmatmul.bf16.gmra.mxu0 %v769
        %v1008 = vpop.f32.mrf.mxu0
        %v1009 = vadd.f32 0.0, %v1008
        %v1010 = vpop.f32.mrf.mxu0
        %v1011 = vadd.f32 0.0, %v1010
        %1012 = vmatmul.bf16.gmra.mxu0 %v771
        %v1013 = vpop.f32.mrf.mxu0
        %v1014 = vadd.f32 0.0, %v1013
        %v1015 = vpop.f32.mrf.mxu0
        %v1016 = vadd.f32 0.0, %v1015
        %1017 = vmatmul.bf16.gmra.mxu0 %v773
        %v1018 = vpop.f32.mrf.mxu0
        %v1019 = vadd.f32 0.0, %v1018
        %v1020 = vpop.f32.mrf.mxu0
        %v1021 = vadd.f32 0.0, %v1020
        %1022 = vmatmul.bf16.gmra.mxu0 %v775
        %v1023 = vpop.f32.mrf.mxu0
        %v1024 = vadd.f32 0.0, %v1023
        %v1025 = vpop.f32.mrf.mxu0
        %v1026 = vadd.f32 0.0, %v1025
        %1027 = vmatmul.bf16.gmra.mxu0 %v777
        %v1028 = vpop.f32.mrf.mxu0
        %v1029 = vadd.f32 0.0, %v1028
        %v1030 = vpop.f32.mrf.mxu0
        %v1031 = vadd.f32 0.0, %v1030
        %1032 = vmatmul.bf16.gmra.mxu0 %v779
        %v1033 = vpop.f32.mrf.mxu0
        %v1034 = vadd.f32 0.0, %v1033
        %v1035 = vpop.f32.mrf.mxu0
        %v1036 = vadd.f32 0.0, %v1035
        %1037 = vmatmul.bf16.gmra.mxu0 %v781
        %v1038 = vpop.f32.mrf.mxu0
        %v1039 = vadd.f32 0.0, %v1038
        %v1040 = vpop.f32.mrf.mxu0
        %v1041 = vadd.f32 0.0, %v1040
        %1042 = vmatmul.bf16.gmra.mxu0 %v783
        %v1043 = vpop.f32.mrf.mxu0
        %v1044 = vadd.f32 0.0, %v1043
        %v1045 = vpop.f32.mrf.mxu0
        %v1046 = vadd.f32 0.0, %v1045
        %1047 = vmatmul.bf16.gmra.mxu0 %v785
        %v1048 = vpop.f32.mrf.mxu0
        %v1049 = vadd.f32 0.0, %v1048
        %v1050 = vpop.f32.mrf.mxu0
        %v1051 = vadd.f32 0.0, %v1050
        %1052 = vmatmul.bf16.gmra.mxu0 %v787
        %v1053 = vpop.f32.mrf.mxu0
        %v1054 = vadd.f32 0.0, %v1053
        %v1055 = vpop.f32.mrf.mxu0
        %v1056 = vadd.f32 0.0, %v1055
        %1057 = vmatmul.bf16.gmra.mxu0 %v789
        %v1058 = vpop.f32.mrf.mxu0
        %v1059 = vadd.f32 0.0, %v1058
        %v1060 = vpop.f32.mrf.mxu0
        %v1061 = vadd.f32 0.0, %v1060
        %1062 = vmatmul.bf16.gmra.mxu0 %v791
        %v1063 = vpop.f32.mrf.mxu0
        %v1064 = vadd.f32 0.0, %v1063
        %v1065 = vpop.f32.mrf.mxu0
        %v1066 = vadd.f32 0.0, %v1065
        %1067 = vmatmul.bf16.gmra.mxu0 %v793
        %v1068 = vpop.f32.mrf.mxu0
        %v1069 = vadd.f32 0.0, %v1068
        %v1070 = vpop.f32.mrf.mxu0
        %v1071 = vadd.f32 0.0, %v1070
        %1072 = vmatmul.bf16.gmra.mxu0 %v795
        %v1073 = vpop.f32.mrf.mxu0
        %v1074 = vadd.f32 0.0, %v1073
        %v1075 = vpop.f32.mrf.mxu0
        %v1076 = vadd.f32 0.0, %v1075
        %1077 = vmatmul.bf16.gmra.mxu0 %v797
        %v1078 = vpop.f32.mrf.mxu0
        %v1079 = vadd.f32 0.0, %v1078
        %v1080 = vpop.f32.mrf.mxu0
        %v1081 = vadd.f32 0.0, %v1080
        %1082 = vmatmul.bf16.gmra.mxu0 %v799
        %v1083 = vpop.f32.mrf.mxu0
        %v1084 = vadd.f32 0.0, %v1083
        %v1085 = vpop.f32.mrf.mxu0
        %v1086 = vadd.f32 0.0, %v1085
        %1087 = vmatmul.bf16.gmra.mxu0 %v801
        %v1088 = vpop.f32.mrf.mxu0
        %v1089 = vadd.f32 0.0, %v1088
        %v1090 = vpop.f32.mrf.mxu0
        %v1091 = vadd.f32 0.0, %v1090
        %1092 = vmatmul.bf16.gmra.mxu0 %v803
        %v1093 = vpop.f32.mrf.mxu0
        %v1094 = vadd.f32 0.0, %v1093
        %v1095 = vpop.f32.mrf.mxu0
        %v1096 = vadd.f32 0.0, %v1095
        %1097 = vmatmul.bf16.gmra.mxu0 %v805
        %v1098 = vpop.f32.mrf.mxu0
        %v1099 = vadd.f32 0.0, %v1098
        %v1100 = vpop.f32.mrf.mxu0
        %v1101 = vadd.f32 0.0, %v1100
        %1102 = vmatmul.bf16.gmra.mxu0 %v807
        %v1103 = vpop.f32.mrf.mxu0
        %v1104 = vadd.f32 0.0, %v1103
        %v1105 = vpop.f32.mrf.mxu0
        %v1106 = vadd.f32 0.0, %v1105
        %1107 = vmatmul.bf16.gmra.mxu0 %v809
        %v1108 = vpop.f32.mrf.mxu0
        %v1109 = vadd.f32 0.0, %v1108
        %v1110 = vpop.f32.mrf.mxu0
        %v1111 = vadd.f32 0.0, %v1110
        %1112 = vmatmul.bf16.gmra.mxu0 %v811
        %v1113 = vpop.f32.mrf.mxu0
        %v1114 = vadd.f32 0.0, %v1113
        %v1115 = vpop.f32.mrf.mxu0
        %v1116 = vadd.f32 0.0, %v1115
        %1117 = vmatmul.bf16.gmra.mxu0 %v813
        %v1118 = vpop.f32.mrf.mxu0
        %v1119 = vadd.f32 0.0, %v1118
        %v1120 = vpop.f32.mrf.mxu0
        %v1121 = vadd.f32 0.0, %v1120
        %1122 = vmatmul.bf16.gmra.mxu0 %v815
        %v1123 = vpop.f32.mrf.mxu0
        %v1124 = vadd.f32 0.0, %v1123
        %v1125 = vpop.f32.mrf.mxu0
        %v1126 = vadd.f32 0.0, %v1125
        %1127 = vmatmul.bf16.gmra.mxu0 %v817
        %v1128 = vpop.f32.mrf.mxu0
        %v1129 = vadd.f32 0.0, %v1128
        %v1130 = vpop.f32.mrf.mxu0
        %v1131 = vadd.f32 0.0, %v1130
        %1132 = vmatmul.bf16.gmra.mxu0 %v819
        %v1133 = vpop.f32.mrf.mxu0
        %v1134 = vadd.f32 0.0, %v1133
        %v1135 = vpop.f32.mrf.mxu0
        %v1136 = vadd.f32 0.0, %v1135
        %1137 = vmatmul.bf16.gmra.mxu0 %v821
        %v1138 = vpop.f32.mrf.mxu0
        %v1139 = vadd.f32 0.0, %v1138
        %v1140 = vpop.f32.mrf.mxu0
        %v1141 = vadd.f32 0.0, %v1140
        %1142 = vmatmul.bf16.gmra.mxu0 %v823
        %v1143 = vpop.f32.mrf.mxu0
        %v1144 = vadd.f32 0.0, %v1143
        %v1145 = vpop.f32.mrf.mxu0
        %v1146 = vadd.f32 0.0, %v1145
        %1147 = vmatmul.bf16.gmra.mxu0 %v825
        %v1148 = vpop.f32.mrf.mxu0
        %v1149 = vadd.f32 0.0, %v1148
        %v1150 = vpop.f32.mrf.mxu0
        %v1151 = vadd.f32 0.0, %v1150
        %1152 = vmatmul.bf16.gmra.mxu0 %v827
        %v1153 = vpop.f32.mrf.mxu0
        %v1154 = vadd.f32 0.0, %v1153
        %v1155 = vpop.f32.mrf.mxu0
        %v1156 = vadd.f32 0.0, %v1155
        %1157 = vdwg.mxu0
        %1158 = vmatpush.bf16.msra.mxu0 %v972
        %1159 = vmatpush.bf16.msra.mxu0 %v971
        %1160 = vmatpush.bf16.msra.mxu0 %v970
        %1161 = vmatpush.bf16.msra.mxu0 %v969
        %1162 = vmatpush.bf16.msra.mxu0 %v968
        %1163 = vmatpush.bf16.msra.mxu0 %v967
        %1164 = vmatpush.bf16.msra.mxu0 %v966
        %1165 = vmatpush.bf16.msra.mxu0 %v965
        %1166 = vmatmul.bf16.gmra.mxu0 %v766
        %v1167 = vpop.f32.mrf.mxu0
        %v1168 = vadd.f32 %v999, %v1167
        %v1169 = vpop.f32.mrf.mxu0
        %v1170 = vadd.f32 %v1001, %v1169
        %1171 = vmatmul.bf16.gmra.mxu0 %v768
        %v1172 = vpop.f32.mrf.mxu0
        %v1173 = vadd.f32 %v1004, %v1172
        %v1174 = vpop.f32.mrf.mxu0
        %v1175 = vadd.f32 %v1006, %v1174
        %1176 = vmatmul.bf16.gmra.mxu0 %v770
        %v1177 = vpop.f32.mrf.mxu0
        %v1178 = vadd.f32 %v1009, %v1177
        %v1179 = vpop.f32.mrf.mxu0
        %v1180 = vadd.f32 %v1011, %v1179
        %1181 = vmatmul.bf16.gmra.mxu0 %v772
        %v1182 = vpop.f32.mrf.mxu0
        %v1183 = vadd.f32 %v1014, %v1182
        %v1184 = vpop.f32.mrf.mxu0
        %v1185 = vadd.f32 %v1016, %v1184
        %1186 = vmatmul.bf16.gmra.mxu0 %v774
        %v1187 = vpop.f32.mrf.mxu0
        %v1188 = vadd.f32 %v1019, %v1187
        %v1189 = vpop.f32.mrf.mxu0
        %v1190 = vadd.f32 %v1021, %v1189
        %1191 = vmatmul.bf16.gmra.mxu0 %v776
        %v1192 = vpop.f32.mrf.mxu0
        %v1193 = vadd.f32 %v1024, %v1192
        %v1194 = vpop.f32.mrf.mxu0
        %v1195 = vadd.f32 %v1026, %v1194
        %1196 = vmatmul.bf16.gmra.mxu0 %v778
        %v1197 = vpop.f32.mrf.mxu0
        %v1198 = vadd.f32 %v1029, %v1197
        %v1199 = vpop.f32.mrf.mxu0
        %v1200 = vadd.f32 %v1031, %v1199
        %1201 = vmatmul.bf16.gmra.mxu0 %v780
        %v1202 = vpop.f32.mrf.mxu0
        %v1203 = vadd.f32 %v1034, %v1202
        %v1204 = vpop.f32.mrf.mxu0
        %v1205 = vadd.f32 %v1036, %v1204
        %1206 = vmatmul.bf16.gmra.mxu0 %v782
        %v1207 = vpop.f32.mrf.mxu0
        %v1208 = vadd.f32 %v1039, %v1207
        %v1209 = vpop.f32.mrf.mxu0
        %v1210 = vadd.f32 %v1041, %v1209
        %1211 = vmatmul.bf16.gmra.mxu0 %v784
        %v1212 = vpop.f32.mrf.mxu0
        %v1213 = vadd.f32 %v1044, %v1212
        %v1214 = vpop.f32.mrf.mxu0
        %v1215 = vadd.f32 %v1046, %v1214
        %1216 = vmatmul.bf16.gmra.mxu0 %v786
        %v1217 = vpop.f32.mrf.mxu0
        %v1218 = vadd.f32 %v1049, %v1217
        %v1219 = vpop.f32.mrf.mxu0
        %v1220 = vadd.f32 %v1051, %v1219
        %1221 = vmatmul.bf16.gmra.mxu0 %v788
        %v1222 = vpop.f32.mrf.mxu0
        %v1223 = vadd.f32 %v1054, %v1222
        %v1224 = vpop.f32.mrf.mxu0
        %v1225 = vadd.f32 %v1056, %v1224
        %1226 = vmatmul.bf16.gmra.mxu0 %v790
        %v1227 = vpop.f32.mrf.mxu0
        %v1228 = vadd.f32 %v1059, %v1227
        %v1229 = vpop.f32.mrf.mxu0
        %v1230 = vadd.f32 %v1061, %v1229
        %1231 = vmatmul.bf16.gmra.mxu0 %v792
        %v1232 = vpop.f32.mrf.mxu0
        %v1233 = vadd.f32 %v1064, %v1232
        %v1234 = vpop.f32.mrf.mxu0
        %v1235 = vadd.f32 %v1066, %v1234
        %1236 = vmatmul.bf16.gmra.mxu0 %v794
        %v1237 = vpop.f32.mrf.mxu0
        %v1238 = vadd.f32 %v1069, %v1237
        %v1239 = vpop.f32.mrf.mxu0
        %v1240 = vadd.f32 %v1071, %v1239
        %1241 = vmatmul.bf16.gmra.mxu0 %v796
        %v1242 = vpop.f32.mrf.mxu0
        %v1243 = vadd.f32 %v1074, %v1242
        %v1244 = vpop.f32.mrf.mxu0
        %v1245 = vadd.f32 %v1076, %v1244
        %1246 = vmatmul.bf16.gmra.mxu0 %v798
        %v1247 = vpop.f32.mrf.mxu0
        %v1248 = vadd.f32 %v1079, %v1247
        %v1249 = vpop.f32.mrf.mxu0
        %v1250 = vadd.f32 %v1081, %v1249
        %1251 = vmatmul.bf16.gmra.mxu0 %v800
        %v1252 = vpop.f32.mrf.mxu0
        %v1253 = vadd.f32 %v1084, %v1252
        %v1254 = vpop.f32.mrf.mxu0
        %v1255 = vadd.f32 %v1086, %v1254
        %1256 = vmatmul.bf16.gmra.mxu0 %v802
        %v1257 = vpop.f32.mrf.mxu0
        %v1258 = vadd.f32 %v1089, %v1257
        %v1259 = vpop.f32.mrf.mxu0
        %v1260 = vadd.f32 %v1091, %v1259
        %1261 = vmatmul.bf16.gmra.mxu0 %v804
        %v1262 = vpop.f32.mrf.mxu0
        %v1263 = vadd.f32 %v1094, %v1262
        %v1264 = vpop.f32.mrf.mxu0
        %v1265 = vadd.f32 %v1096, %v1264
        %1266 = vmatmul.bf16.gmra.mxu0 %v806
        %v1267 = vpop.f32.mrf.mxu0
        %v1268 = vadd.f32 %v1099, %v1267
        %v1269 = vpop.f32.mrf.mxu0
        %v1270 = vadd.f32 %v1101, %v1269
        %1271 = vmatmul.bf16.gmra.mxu0 %v808
        %v1272 = vpop.f32.mrf.mxu0
        %v1273 = vadd.f32 %v1104, %v1272
        %v1274 = vpop.f32.mrf.mxu0
        %v1275 = vadd.f32 %v1106, %v1274
        %1276 = vmatmul.bf16.gmra.mxu0 %v810
        %v1277 = vpop.f32.mrf.mxu0
        %v1278 = vadd.f32 %v1109, %v1277
        %v1279 = vpop.f32.mrf.mxu0
        %v1280 = vadd.f32 %v1111, %v1279
        %1281 = vmatmul.bf16.gmra.mxu0 %v812
        %v1282 = vpop.f32.mrf.mxu0
        %v1283 = vadd.f32 %v1114, %v1282
        %v1284 = vpop.f32.mrf.mxu0
        %v1285 = vadd.f32 %v1116, %v1284
        %1286 = vmatmul.bf16.gmra.mxu0 %v814
        %v1287 = vpop.f32.mrf.mxu0
        %v1288 = vadd.f32 %v1119, %v1287
        %v1289 = vpop.f32.mrf.mxu0
        %v1290 = vadd.f32 %v1121, %v1289
        %1291 = vmatmul.bf16.gmra.mxu0 %v816
        %v1292 = vpop.f32.mrf.mxu0
        %v1293 = vadd.f32 %v1124, %v1292
        %v1294 = vpop.f32.mrf.mxu0
        %v1295 = vadd.f32 %v1126, %v1294
        %1296 = vmatmul.bf16.gmra.mxu0 %v818
        %v1297 = vpop.f32.mrf.mxu0
        %v1298 = vadd.f32 %v1129, %v1297
        %v1299 = vpop.f32.mrf.mxu0
        %v1300 = vadd.f32 %v1131, %v1299
        %1301 = vmatmul.bf16.gmra.mxu0 %v820
        %v1302 = vpop.f32.mrf.mxu0
        %v1303 = vadd.f32 %v1134, %v1302
        %v1304 = vpop.f32.mrf.mxu0
        %v1305 = vadd.f32 %v1136, %v1304
        %1306 = vmatmul.bf16.gmra.mxu0 %v822
        %v1307 = vpop.f32.mrf.mxu0
        %v1308 = vadd.f32 %v1139, %v1307
        %v1309 = vpop.f32.mrf.mxu0
        %v1310 = vadd.f32 %v1141, %v1309
        %1311 = vmatmul.bf16.gmra.mxu0 %v824
        %v1312 = vpop.f32.mrf.mxu0
        %v1313 = vadd.f32 %v1144, %v1312
        %v1314 = vpop.f32.mrf.mxu0
        %v1315 = vadd.f32 %v1146, %v1314
        %1316 = vmatmul.bf16.gmra.mxu0 %v826
        %v1317 = vpop.f32.mrf.mxu0
        %v1318 = vadd.f32 %v1149, %v1317
        %v1319 = vpop.f32.mrf.mxu0
        %v1320 = vadd.f32 %v1151, %v1319
        %1321 = vmatmul.bf16.gmra.mxu0 %v828
        %v1322 = vpop.f32.mrf.mxu0
        %v1323 = vadd.f32 %v1154, %v1322
        %v1324 = vpop.f32.mrf.mxu0
        %v1325 = vadd.f32 %v1156, %v1324
        %1326 = vdwg.mxu0
        %v1327 = vadd.f32 %v413, %v1168
        %v1328 = vadd.f32 %v414, %v1170
        %v1329 = vadd.f32 %v415, %v1173
        %v1330 = vadd.f32 %v416, %v1175
        %v1331 = vadd.f32 %v417, %v1178
        %v1332 = vadd.f32 %v418, %v1180
        %v1333 = vadd.f32 %v419, %v1183
        %v1334 = vadd.f32 %v420, %v1185
        %v1335 = vadd.f32 %v421, %v1188
        %v1336 = vadd.f32 %v422, %v1190
        %v1337 = vadd.f32 %v423, %v1193
        %v1338 = vadd.f32 %v424, %v1195
        %v1339 = vadd.f32 %v425, %v1198
        %v1340 = vadd.f32 %v426, %v1200
        %v1341 = vadd.f32 %v427, %v1203
        %v1342 = vadd.f32 %v428, %v1205
        %v1343 = vadd.f32 %v429, %v1208
        %v1344 = vadd.f32 %v430, %v1210
        %v1345 = vadd.f32 %v431, %v1213
        %v1346 = vadd.f32 %v432, %v1215
        %v1347 = vadd.f32 %v433, %v1218
        %v1348 = vadd.f32 %v434, %v1220
        %v1349 = vadd.f32 %v435, %v1223
        %v1350 = vadd.f32 %v436, %v1225
        %v1351 = vadd.f32 %v437, %v1228
        %v1352 = vadd.f32 %v438, %v1230
        %v1353 = vadd.f32 %v439, %v1233
        %v1354 = vadd.f32 %v440, %v1235
        %v1355 = vadd.f32 %v441, %v1238
        %v1356 = vadd.f32 %v442, %v1240
        %v1357 = vadd.f32 %v443, %v1243
        %v1358 = vadd.f32 %v444, %v1245
        %v1359 = vadd.f32 %v445, %v1248
        %v1360 = vadd.f32 %v446, %v1250
        %v1361 = vadd.f32 %v447, %v1253
        %v1362 = vadd.f32 %v448, %v1255
        %v1363 = vadd.f32 %v449, %v1258
        %v1364 = vadd.f32 %v450, %v1260
        %v1365 = vadd.f32 %v451, %v1263
        %v1366 = vadd.f32 %v452, %v1265
        %v1367 = vadd.f32 %v453, %v1268
        %v1368 = vadd.f32 %v454, %v1270
        %v1369 = vadd.f32 %v455, %v1273
        %v1370 = vadd.f32 %v456, %v1275
        %v1371 = vadd.f32 %v457, %v1278
        %v1372 = vadd.f32 %v458, %v1280
        %v1373 = vadd.f32 %v459, %v1283
        %v1374 = vadd.f32 %v460, %v1285
        %v1375 = vadd.f32 %v461, %v1288
        %v1376 = vadd.f32 %v462, %v1290
        %v1377 = vadd.f32 %v463, %v1293
        %v1378 = vadd.f32 %v464, %v1295
        %v1379 = vadd.f32 %v465, %v1298
        %v1380 = vadd.f32 %v466, %v1300
        %v1381 = vadd.f32 %v467, %v1303
        %v1382 = vadd.f32 %v468, %v1305
        %v1383 = vadd.f32 %v469, %v1308
        %v1384 = vadd.f32 %v470, %v1310
        %v1385 = vadd.f32 %v471, %v1313
        %v1386 = vadd.f32 %v472, %v1315
        %v1387 = vadd.f32 %v473, %v1318
        %v1388 = vadd.f32 %v474, %v1320
        %v1389 = vadd.f32 %v475, %v1323
        %v1390 = vadd.f32 %v476, %v1325
        %1391 = vst [vmem:[#allocation2] sm:$0xff] %v1327
        %1392 = vst [vmem:[#allocation2 + $0x8] sm:$0xff] %v1328
        %1393 = vst [vmem:[#allocation2 + $0x10] sm:$0xff] %v1329
        %1394 = vst [vmem:[#allocation2 + $0x18] sm:$0xff] %v1330
        %1395 = vst [vmem:[#allocation2 + $0x20] sm:$0xff] %v1331
        %1396 = vst [vmem:[#allocation2 + $0x28] sm:$0xff] %v1332
        %1397 = vst [vmem:[#allocation2 + $0x30] sm:$0xff] %v1333
        %1398 = vst [vmem:[#allocation2 + $0x38] sm:$0xff] %v1334
        %1399 = vst [vmem:[#allocation2 + $0x40] sm:$0xff] %v1335
        %1400 = vst [vmem:[#allocation2 + $0x48] sm:$0xff] %v1336
        %1401 = vst [vmem:[#allocation2 + $0x50] sm:$0xff] %v1337
        %1402 = vst [vmem:[#allocation2 + $0x58] sm:$0xff] %v1338
        %1403 = vst [vmem:[#allocation2 + $0x60] sm:$0xff] %v1339
        %1404 = vst [vmem:[#allocation2 + $0x68] sm:$0xff] %v1340
        %1405 = vst [vmem:[#allocation2 + $0x70] sm:$0xff] %v1341
        %1406 = vst [vmem:[#allocation2 + $0x78] sm:$0xff] %v1342
        %1407 = vst [vmem:[#allocation2 + $0x80] sm:$0xff] %v1343
        %1408 = vst [vmem:[#allocation2 + $0x88] sm:$0xff] %v1344
        %1409 = vst [vmem:[#allocation2 + $0x90] sm:$0xff] %v1345
        %1410 = vst [vmem:[#allocation2 + $0x98] sm:$0xff] %v1346
        %1411 = vst [vmem:[#allocation2 + $0xa0] sm:$0xff] %v1347
        %1412 = vst [vmem:[#allocation2 + $0xa8] sm:$0xff] %v1348
        %1413 = vst [vmem:[#allocation2 + $0xb0] sm:$0xff] %v1349
        %1414 = vst [vmem:[#allocation2 + $0xb8] sm:$0xff] %v1350
        %1415 = vst [vmem:[#allocation2 + $0xc0] sm:$0xff] %v1351
        %1416 = vst [vmem:[#allocation2 + $0xc8] sm:$0xff] %v1352
        %1417 = vst [vmem:[#allocation2 + $0xd0] sm:$0xff] %v1353
        %1418 = vst [vmem:[#allocation2 + $0xd8] sm:$0xff] %v1354
        %1419 = vst [vmem:[#allocation2 + $0xe0] sm:$0xff] %v1355
        %1420 = vst [vmem:[#allocation2 + $0xe8] sm:$0xff] %v1356
        %1421 = vst [vmem:[#allocation2 + $0xf0] sm:$0xff] %v1357
        %1422 = vst [vmem:[#allocation2 + $0xf8] sm:$0xff] %v1358
        %1423 = vst [vmem:[#allocation2 + $0x100] sm:$0xff] %v1359
        %1424 = vst [vmem:[#allocation2 + $0x108] sm:$0xff] %v1360
        %1425 = vst [vmem:[#allocation2 + $0x110] sm:$0xff] %v1361
        %1426 = vst [vmem:[#allocation2 + $0x118] sm:$0xff] %v1362
        %1427 = vst [vmem:[#allocation2 + $0x120] sm:$0xff] %v1363
        %1428 = vst [vmem:[#allocation2 + $0x128] sm:$0xff] %v1364
        %1429 = vst [vmem:[#allocation2 + $0x130] sm:$0xff] %v1365
        %1430 = vst [vmem:[#allocation2 + $0x138] sm:$0xff] %v1366
        %1431 = vst [vmem:[#allocation2 + $0x140] sm:$0xff] %v1367
        %1432 = vst [vmem:[#allocation2 + $0x148] sm:$0xff] %v1368
        %1433 = vst [vmem:[#allocation2 + $0x150] sm:$0xff] %v1369
        %1434 = vst [vmem:[#allocation2 + $0x158] sm:$0xff] %v1370
        %1435 = vst [vmem:[#allocation2 + $0x160] sm:$0xff] %v1371
        %1436 = vst [vmem:[#allocation2 + $0x168] sm:$0xff] %v1372
        %1437 = vst [vmem:[#allocation2 + $0x170] sm:$0xff] %v1373
        %1438 = vst [vmem:[#allocation2 + $0x178] sm:$0xff] %v1374
        %1439 = vst [vmem:[#allocation2 + $0x180] sm:$0xff] %v1375
        %1440 = vst [vmem:[#allocation2 + $0x188] sm:$0xff] %v1376
        %1441 = vst [vmem:[#allocation2 + $0x190] sm:$0xff] %v1377
        %1442 = vst [vmem:[#allocation2 + $0x198] sm:$0xff] %v1378
        %1443 = vst [vmem:[#allocation2 + $0x1a0] sm:$0xff] %v1379
        %1444 = vst [vmem:[#allocation2 + $0x1a8] sm:$0xff] %v1380
        %1445 = vst [vmem:[#allocation2 + $0x1b0] sm:$0xff] %v1381
        %1446 = vst [vmem:[#allocation2 + $0x1b8] sm:$0xff] %v1382
        %1447 = vst [vmem:[#allocation2 + $0x1c0] sm:$0xff] %v1383
        %1448 = vst [vmem:[#allocation2 + $0x1c8] sm:$0xff] %v1384
        %1449 = vst [vmem:[#allocation2 + $0x1d0] sm:$0xff] %v1385
        %1450 = vst [vmem:[#allocation2 + $0x1d8] sm:$0xff] %v1386
        %1451 = vst [vmem:[#allocation2 + $0x1e0] sm:$0xff] %v1387
        %1452 = vst [vmem:[#allocation2 + $0x1e8] sm:$0xff] %v1388
        %1453 = vst [vmem:[#allocation2 + $0x1f0] sm:$0xff] %v1389
        %1454 = vst [vmem:[#allocation2 + $0x1f8] sm:$0xff] %v1390
        // Predicated region
        $region53: #{tpu_custom_call.1} parent=39 // pred_check
          %p1455 = pneg %p345
        $region54: #{tpu_custom_call.1} parent=39 // pred_check_branch
          %1457 = sbr.rel (%p1455) target = $region56
        $region55: #{tpu_custom_call.1} parent=39 // pred_region
          %v1458 = vld [vmem:[#allocation2] sm:$0xff]
          %v1459 = vld [vmem:[#allocation2 + $0x8] sm:$0xff]
          %v1460 = vld [vmem:[#allocation2 + $0x10] sm:$0xff]
          %v1461 = vld [vmem:[#allocation2 + $0x18] sm:$0xff]
          %v1462 = vld [vmem:[#allocation2 + $0x20] sm:$0xff]
          %v1463 = vld [vmem:[#allocation2 + $0x28] sm:$0xff]
          %v1464 = vld [vmem:[#allocation2 + $0x30] sm:$0xff]
          %v1465 = vld [vmem:[#allocation2 + $0x38] sm:$0xff]
          %v1466 = vld [vmem:[#allocation2 + $0x40] sm:$0xff]
          %v1467 = vld [vmem:[#allocation2 + $0x48] sm:$0xff]
          %v1468 = vld [vmem:[#allocation2 + $0x50] sm:$0xff]
          %v1469 = vld [vmem:[#allocation2 + $0x58] sm:$0xff]
          %v1470 = vld [vmem:[#allocation2 + $0x60] sm:$0xff]
          %v1471 = vld [vmem:[#allocation2 + $0x68] sm:$0xff]
          %v1472 = vld [vmem:[#allocation2 + $0x70] sm:$0xff]
          %v1473 = vld [vmem:[#allocation2 + $0x78] sm:$0xff]
          %v1474 = vld [vmem:[#allocation2 + $0x80] sm:$0xff]
          %v1475 = vld [vmem:[#allocation2 + $0x88] sm:$0xff]
          %v1476 = vld [vmem:[#allocation2 + $0x90] sm:$0xff]
          %v1477 = vld [vmem:[#allocation2 + $0x98] sm:$0xff]
          %v1478 = vld [vmem:[#allocation2 + $0xa0] sm:$0xff]
          %v1479 = vld [vmem:[#allocation2 + $0xa8] sm:$0xff]
          %v1480 = vld [vmem:[#allocation2 + $0xb0] sm:$0xff]
          %v1481 = vld [vmem:[#allocation2 + $0xb8] sm:$0xff]
          %v1482 = vld [vmem:[#allocation2 + $0xc0] sm:$0xff]
          %v1483 = vld [vmem:[#allocation2 + $0xc8] sm:$0xff]
          %v1484 = vld [vmem:[#allocation2 + $0xd0] sm:$0xff]
          %v1485 = vld [vmem:[#allocation2 + $0xd8] sm:$0xff]
          %v1486 = vld [vmem:[#allocation2 + $0xe0] sm:$0xff]
          %v1487 = vld [vmem:[#allocation2 + $0xe8] sm:$0xff]
          %v1488 = vld [vmem:[#allocation2 + $0xf0] sm:$0xff]
          %v1489 = vld [vmem:[#allocation2 + $0xf8] sm:$0xff]
          %v1490 = vld [vmem:[#allocation2 + $0x100] sm:$0xff]
          %v1491 = vld [vmem:[#allocation2 + $0x108] sm:$0xff]
          %v1492 = vld [vmem:[#allocation2 + $0x110] sm:$0xff]
          %v1493 = vld [vmem:[#allocation2 + $0x118] sm:$0xff]
          %v1494 = vld [vmem:[#allocation2 + $0x120] sm:$0xff]
          %v1495 = vld [vmem:[#allocation2 + $0x128] sm:$0xff]
          %v1496 = vld [vmem:[#allocation2 + $0x130] sm:$0xff]
          %v1497 = vld [vmem:[#allocation2 + $0x138] sm:$0xff]
          %v1498 = vld [vmem:[#allocation2 + $0x140] sm:$0xff]
          %v1499 = vld [vmem:[#allocation2 + $0x148] sm:$0xff]
          %v1500 = vld [vmem:[#allocation2 + $0x150] sm:$0xff]
          %v1501 = vld [vmem:[#allocation2 + $0x158] sm:$0xff]
          %v1502 = vld [vmem:[#allocation2 + $0x160] sm:$0xff]
          %v1503 = vld [vmem:[#allocation2 + $0x168] sm:$0xff]
          %v1504 = vld [vmem:[#allocation2 + $0x170] sm:$0xff]
          %v1505 = vld [vmem:[#allocation2 + $0x178] sm:$0xff]
          %v1506 = vld [vmem:[#allocation2 + $0x180] sm:$0xff]
          %v1507 = vld [vmem:[#allocation2 + $0x188] sm:$0xff]
          %v1508 = vld [vmem:[#allocation2 + $0x190] sm:$0xff]
          %v1509 = vld [vmem:[#allocation2 + $0x198] sm:$0xff]
          %v1510 = vld [vmem:[#allocation2 + $0x1a0] sm:$0xff]
          %v1511 = vld [vmem:[#allocation2 + $0x1a8] sm:$0xff]
          %v1512 = vld [vmem:[#allocation2 + $0x1b0] sm:$0xff]
          %v1513 = vld [vmem:[#allocation2 + $0x1b8] sm:$0xff]
          %v1514 = vld [vmem:[#allocation2 + $0x1c0] sm:$0xff]
          %v1515 = vld [vmem:[#allocation2 + $0x1c8] sm:$0xff]
          %v1516 = vld [vmem:[#allocation2 + $0x1d0] sm:$0xff]
          %v1517 = vld [vmem:[#allocation2 + $0x1d8] sm:$0xff]
          %v1518 = vld [vmem:[#allocation2 + $0x1e0] sm:$0xff]
          %v1519 = vld [vmem:[#allocation2 + $0x1e8] sm:$0xff]
          %v1520 = vld [vmem:[#allocation2 + $0x1f0] sm:$0xff]
          %v1521 = vld [vmem:[#allocation2 + $0x1f8] sm:$0xff]
          %v1522 = vld [vmem:[%s337] sm:$0x1]
          %v1524 = vperm.slane %v1522, 0
          %v1526 = vmul.f32 %v1458, %v1524
          %v1527 = vmul.f32 %v1459, %v1524
          %v1528 = vmul.f32 %v1460, %v1524
          %v1529 = vmul.f32 %v1461, %v1524
          %v1530 = vmul.f32 %v1462, %v1524
          %v1531 = vmul.f32 %v1463, %v1524
          %v1532 = vmul.f32 %v1464, %v1524
          %v1533 = vmul.f32 %v1465, %v1524
          %v1534 = vmul.f32 %v1466, %v1524
          %v1535 = vmul.f32 %v1467, %v1524
          %v1536 = vmul.f32 %v1468, %v1524
          %v1537 = vmul.f32 %v1469, %v1524
          %v1538 = vmul.f32 %v1470, %v1524
          %v1539 = vmul.f32 %v1471, %v1524
          %v1540 = vmul.f32 %v1472, %v1524
          %v1541 = vmul.f32 %v1473, %v1524
          %v1542 = vmul.f32 %v1474, %v1524
          %v1543 = vmul.f32 %v1475, %v1524
          %v1544 = vmul.f32 %v1476, %v1524
          %v1545 = vmul.f32 %v1477, %v1524
          %v1546 = vmul.f32 %v1478, %v1524
          %v1547 = vmul.f32 %v1479, %v1524
          %v1548 = vmul.f32 %v1480, %v1524
          %v1549 = vmul.f32 %v1481, %v1524
          %v1550 = vmul.f32 %v1482, %v1524
          %v1551 = vmul.f32 %v1483, %v1524
          %v1552 = vmul.f32 %v1484, %v1524
          %v1553 = vmul.f32 %v1485, %v1524
          %v1554 = vmul.f32 %v1486, %v1524
          %v1555 = vmul.f32 %v1487, %v1524
          %v1556 = vmul.f32 %v1488, %v1524
          %v1557 = vmul.f32 %v1489, %v1524
          %v1558 = vmul.f32 %v1490, %v1524
          %v1559 = vmul.f32 %v1491, %v1524
          %v1560 = vmul.f32 %v1492, %v1524
          %v1561 = vmul.f32 %v1493, %v1524
          %v1562 = vmul.f32 %v1494, %v1524
          %v1563 = vmul.f32 %v1495, %v1524
          %v1564 = vmul.f32 %v1496, %v1524
          %v1565 = vmul.f32 %v1497, %v1524
          %v1566 = vmul.f32 %v1498, %v1524
          %v1567 = vmul.f32 %v1499, %v1524
          %v1568 = vmul.f32 %v1500, %v1524
          %v1569 = vmul.f32 %v1501, %v1524
          %v1570 = vmul.f32 %v1502, %v1524
          %v1571 = vmul.f32 %v1503, %v1524
          %v1572 = vmul.f32 %v1504, %v1524
          %v1573 = vmul.f32 %v1505, %v1524
          %v1574 = vmul.f32 %v1506, %v1524
          %v1575 = vmul.f32 %v1507, %v1524
          %v1576 = vmul.f32 %v1508, %v1524
          %v1577 = vmul.f32 %v1509, %v1524
          %v1578 = vmul.f32 %v1510, %v1524
          %v1579 = vmul.f32 %v1511, %v1524
          %v1580 = vmul.f32 %v1512, %v1524
          %v1581 = vmul.f32 %v1513, %v1524
          %v1582 = vmul.f32 %v1514, %v1524
          %v1583 = vmul.f32 %v1515, %v1524
          %v1584 = vmul.f32 %v1516, %v1524
          %v1585 = vmul.f32 %v1517, %v1524
          %v1586 = vmul.f32 %v1518, %v1524
          %v1587 = vmul.f32 %v1519, %v1524
          %v1588 = vmul.f32 %v1520, %v1524
          %v1589 = vmul.f32 %v1521, %v1524
          %v1590 = vld [vmem:[%s340] sm:$0x1]
          %v1592 = vperm.slane %v1590, 0
          %v1594 = vadd.f32 %v1526, %v1592
          %v1595 = vadd.f32 %v1527, %v1592
          %v1596 = vadd.f32 %v1528, %v1592
          %v1597 = vadd.f32 %v1529, %v1592
          %v1598 = vadd.f32 %v1530, %v1592
          %v1599 = vadd.f32 %v1531, %v1592
          %v1600 = vadd.f32 %v1532, %v1592
          %v1601 = vadd.f32 %v1533, %v1592
          %v1602 = vadd.f32 %v1534, %v1592
          %v1603 = vadd.f32 %v1535, %v1592
          %v1604 = vadd.f32 %v1536, %v1592
          %v1605 = vadd.f32 %v1537, %v1592
          %v1606 = vadd.f32 %v1538, %v1592
          %v1607 = vadd.f32 %v1539, %v1592
          %v1608 = vadd.f32 %v1540, %v1592
          %v1609 = vadd.f32 %v1541, %v1592
          %v1610 = vadd.f32 %v1542, %v1592
          %v1611 = vadd.f32 %v1543, %v1592
          %v1612 = vadd.f32 %v1544, %v1592
          %v1613 = vadd.f32 %v1545, %v1592
          %v1614 = vadd.f32 %v1546, %v1592
          %v1615 = vadd.f32 %v1547, %v1592
          %v1616 = vadd.f32 %v1548, %v1592
          %v1617 = vadd.f32 %v1549, %v1592
          %v1618 = vadd.f32 %v1550, %v1592
          %v1619 = vadd.f32 %v1551, %v1592
          %v1620 = vadd.f32 %v1552, %v1592
          %v1621 = vadd.f32 %v1553, %v1592
          %v1622 = vadd.f32 %v1554, %v1592
          %v1623 = vadd.f32 %v1555, %v1592
          %v1624 = vadd.f32 %v1556, %v1592
          %v1625 = vadd.f32 %v1557, %v1592
          %v1626 = vadd.f32 %v1558, %v1592
          %v1627 = vadd.f32 %v1559, %v1592
          %v1628 = vadd.f32 %v1560, %v1592
          %v1629 = vadd.f32 %v1561, %v1592
          %v1630 = vadd.f32 %v1562, %v1592
          %v1631 = vadd.f32 %v1563, %v1592
          %v1632 = vadd.f32 %v1564, %v1592
          %v1633 = vadd.f32 %v1565, %v1592
          %v1634 = vadd.f32 %v1566, %v1592
          %v1635 = vadd.f32 %v1567, %v1592
          %v1636 = vadd.f32 %v1568, %v1592
          %v1637 = vadd.f32 %v1569, %v1592
          %v1638 = vadd.f32 %v1570, %v1592
          %v1639 = vadd.f32 %v1571, %v1592
          %v1640 = vadd.f32 %v1572, %v1592
          %v1641 = vadd.f32 %v1573, %v1592
          %v1642 = vadd.f32 %v1574, %v1592
          %v1643 = vadd.f32 %v1575, %v1592
          %v1644 = vadd.f32 %v1576, %v1592
          %v1645 = vadd.f32 %v1577, %v1592
          %v1646 = vadd.f32 %v1578, %v1592
          %v1647 = vadd.f32 %v1579, %v1592
          %v1648 = vadd.f32 %v1580, %v1592
          %v1649 = vadd.f32 %v1581, %v1592
          %v1650 = vadd.f32 %v1582, %v1592
          %v1651 = vadd.f32 %v1583, %v1592
          %v1652 = vadd.f32 %v1584, %v1592
          %v1653 = vadd.f32 %v1585, %v1592
          %v1654 = vadd.f32 %v1586, %v1592
          %v1655 = vadd.f32 %v1587, %v1592
          %v1656 = vadd.f32 %v1588, %v1592
          %v1657 = vadd.f32 %v1589, %v1592
          %v1658 = vld [vmem:[%s343] sm:$0x1]
          %v1660 = vperm.slane %v1658, 0
          %v1662 = vmax.f32 %v1594, %v1660
          %v1663 = vmax.f32 %v1595, %v1660
          %v1664 = vmax.f32 %v1596, %v1660
          %v1665 = vmax.f32 %v1597, %v1660
          %v1666 = vmax.f32 %v1598, %v1660
          %v1667 = vmax.f32 %v1599, %v1660
          %v1668 = vmax.f32 %v1600, %v1660
          %v1669 = vmax.f32 %v1601, %v1660
          %v1670 = vmax.f32 %v1602, %v1660
          %v1671 = vmax.f32 %v1603, %v1660
          %v1672 = vmax.f32 %v1604, %v1660
          %v1673 = vmax.f32 %v1605, %v1660
          %v1674 = vmax.f32 %v1606, %v1660
          %v1675 = vmax.f32 %v1607, %v1660
          %v1676 = vmax.f32 %v1608, %v1660
          %v1677 = vmax.f32 %v1609, %v1660
          %v1678 = vmax.f32 %v1610, %v1660
          %v1679 = vmax.f32 %v1611, %v1660
          %v1680 = vmax.f32 %v1612, %v1660
          %v1681 = vmax.f32 %v1613, %v1660
          %v1682 = vmax.f32 %v1614, %v1660
          %v1683 = vmax.f32 %v1615, %v1660
          %v1684 = vmax.f32 %v1616, %v1660
          %v1685 = vmax.f32 %v1617, %v1660
          %v1686 = vmax.f32 %v1618, %v1660
          %v1687 = vmax.f32 %v1619, %v1660
          %v1688 = vmax.f32 %v1620, %v1660
          %v1689 = vmax.f32 %v1621, %v1660
          %v1690 = vmax.f32 %v1622, %v1660
          %v1691 = vmax.f32 %v1623, %v1660
          %v1692 = vmax.f32 %v1624, %v1660
          %v1693 = vmax.f32 %v1625, %v1660
          %v1694 = vmax.f32 %v1626, %v1660
          %v1695 = vmax.f32 %v1627, %v1660
          %v1696 = vmax.f32 %v1628, %v1660
          %v1697 = vmax.f32 %v1629, %v1660
          %v1698 = vmax.f32 %v1630, %v1660
          %v1699 = vmax.f32 %v1631, %v1660
          %v1700 = vmax.f32 %v1632, %v1660
          %v1701 = vmax.f32 %v1633, %v1660
          %v1702 = vmax.f32 %v1634, %v1660
          %v1703 = vmax.f32 %v1635, %v1660
          %v1704 = vmax.f32 %v1636, %v1660
          %v1705 = vmax.f32 %v1637, %v1660
          %v1706 = vmax.f32 %v1638, %v1660
          %v1707 = vmax.f32 %v1639, %v1660
          %v1708 = vmax.f32 %v1640, %v1660
          %v1709 = vmax.f32 %v1641, %v1660
          %v1710 = vmax.f32 %v1642, %v1660
          %v1711 = vmax.f32 %v1643, %v1660
          %v1712 = vmax.f32 %v1644, %v1660
          %v1713 = vmax.f32 %v1645, %v1660
          %v1714 = vmax.f32 %v1646, %v1660
          %v1715 = vmax.f32 %v1647, %v1660
          %v1716 = vmax.f32 %v1648, %v1660
          %v1717 = vmax.f32 %v1649, %v1660
          %v1718 = vmax.f32 %v1650, %v1660
          %v1719 = vmax.f32 %v1651, %v1660
          %v1720 = vmax.f32 %v1652, %v1660
          %v1721 = vmax.f32 %v1653, %v1660
          %v1722 = vmax.f32 %v1654, %v1660
          %v1723 = vmax.f32 %v1655, %v1660
          %v1724 = vmax.f32 %v1656, %v1660
          %v1725 = vmax.f32 %v1657, %v1660
          %v1726 = vpack.c.bf16 %v1662, %v1662
          %v1727 = vpack.c.bf16 %v1663, %v1663
          %v1728 = vpack.c.bf16 %v1664, %v1664
          %v1729 = vpack.c.bf16 %v1665, %v1665
          %v1730 = vpack.c.bf16 %v1666, %v1666
          %v1731 = vpack.c.bf16 %v1667, %v1667
          %v1732 = vpack.c.bf16 %v1668, %v1668
          %v1733 = vpack.c.bf16 %v1669, %v1669
          %v1734 = vpack.c.bf16 %v1670, %v1670
          %v1735 = vpack.c.bf16 %v1671, %v1671
          %v1736 = vpack.c.bf16 %v1672, %v1672
          %v1737 = vpack.c.bf16 %v1673, %v1673
          %v1738 = vpack.c.bf16 %v1674, %v1674
          %v1739 = vpack.c.bf16 %v1675, %v1675
          %v1740 = vpack.c.bf16 %v1676, %v1676
          %v1741 = vpack.c.bf16 %v1677, %v1677
          %v1742 = vpack.c.bf16 %v1678, %v1678
          %v1743 = vpack.c.bf16 %v1679, %v1679
          %v1744 = vpack.c.bf16 %v1680, %v1680
          %v1745 = vpack.c.bf16 %v1681, %v1681
          %v1746 = vpack.c.bf16 %v1682, %v1682
          %v1747 = vpack.c.bf16 %v1683, %v1683
          %v1748 = vpack.c.bf16 %v1684, %v1684
          %v1749 = vpack.c.bf16 %v1685, %v1685
          %v1750 = vpack.c.bf16 %v1686, %v1686
          %v1751 = vpack.c.bf16 %v1687, %v1687
          %v1752 = vpack.c.bf16 %v1688, %v1688
          %v1753 = vpack.c.bf16 %v1689, %v1689
          %v1754 = vpack.c.bf16 %v1690, %v1690
          %v1755 = vpack.c.bf16 %v1691, %v1691
          %v1756 = vpack.c.bf16 %v1692, %v1692
          %v1757 = vpack.c.bf16 %v1693, %v1693
          %v1758 = vpack.c.bf16 %v1694, %v1694
          %v1759 = vpack.c.bf16 %v1695, %v1695
          %v1760 = vpack.c.bf16 %v1696, %v1696
          %v1761 = vpack.c.bf16 %v1697, %v1697
          %v1762 = vpack.c.bf16 %v1698, %v1698
          %v1763 = vpack.c.bf16 %v1699, %v1699
          %v1764 = vpack.c.bf16 %v1700, %v1700
          %v1765 = vpack.c.bf16 %v1701, %v1701
          %v1766 = vpack.c.bf16 %v1702, %v1702
          %v1767 = vpack.c.bf16 %v1703, %v1703
          %v1768 = vpack.c.bf16 %v1704, %v1704
          %v1769 = vpack.c.bf16 %v1705, %v1705
          %v1770 = vpack.c.bf16 %v1706, %v1706
          %v1771 = vpack.c.bf16 %v1707, %v1707
          %v1772 = vpack.c.bf16 %v1708, %v1708
          %v1773 = vpack.c.bf16 %v1709, %v1709
          %v1774 = vpack.c.bf16 %v1710, %v1710
          %v1775 = vpack.c.bf16 %v1711, %v1711
          %v1776 = vpack.c.bf16 %v1712, %v1712
          %v1777 = vpack.c.bf16 %v1713, %v1713
          %v1778 = vpack.c.bf16 %v1714, %v1714
          %v1779 = vpack.c.bf16 %v1715, %v1715
          %v1780 = vpack.c.bf16 %v1716, %v1716
          %v1781 = vpack.c.bf16 %v1717, %v1717
          %v1782 = vpack.c.bf16 %v1718, %v1718
          %v1783 = vpack.c.bf16 %v1719, %v1719
          %v1784 = vpack.c.bf16 %v1720, %v1720
          %v1785 = vpack.c.bf16 %v1721, %v1721
          %v1786 = vpack.c.bf16 %v1722, %v1722
          %v1787 = vpack.c.bf16 %v1723, %v1723
          %v1788 = vpack.c.bf16 %v1724, %v1724
          %v1789 = vpack.c.bf16 %v1725, %v1725
          %1790 = vst [vmem:[%s331] sm:$0xf] %v1726
          %1791 = vst [vmem:[%s331 + $0x4] sm:$0xf] %v1727
          %1792 = vst [vmem:[%s331 + $0x8] sm:$0xf] %v1728
          %1793 = vst [vmem:[%s331 + $0xc] sm:$0xf] %v1729
          %1794 = vst [vmem:[%s331 + $0x10] sm:$0xf] %v1730
          %1795 = vst [vmem:[%s331 + $0x14] sm:$0xf] %v1731
          %1796 = vst [vmem:[%s331 + $0x18] sm:$0xf] %v1732
          %1797 = vst [vmem:[%s331 + $0x1c] sm:$0xf] %v1733
          %1798 = vst [vmem:[%s331 + $0x20] sm:$0xf] %v1734
          %1799 = vst [vmem:[%s331 + $0x24] sm:$0xf] %v1735
          %1800 = vst [vmem:[%s331 + $0x28] sm:$0xf] %v1736
          %1801 = vst [vmem:[%s331 + $0x2c] sm:$0xf] %v1737
          %1802 = vst [vmem:[%s331 + $0x30] sm:$0xf] %v1738
          %1803 = vst [vmem:[%s331 + $0x34] sm:$0xf] %v1739
          %1804 = vst [vmem:[%s331 + $0x38] sm:$0xf] %v1740
          %1805 = vst [vmem:[%s331 + $0x3c] sm:$0xf] %v1741
          %1806 = vst [vmem:[%s331 + $0x40] sm:$0xf] %v1742
          %1807 = vst [vmem:[%s331 + $0x44] sm:$0xf] %v1743
          %1808 = vst [vmem:[%s331 + $0x48] sm:$0xf] %v1744
          %1809 = vst [vmem:[%s331 + $0x4c] sm:$0xf] %v1745
          %1810 = vst [vmem:[%s331 + $0x50] sm:$0xf] %v1746
          %1811 = vst [vmem:[%s331 + $0x54] sm:$0xf] %v1747
          %1812 = vst [vmem:[%s331 + $0x58] sm:$0xf] %v1748
          %1813 = vst [vmem:[%s331 + $0x5c] sm:$0xf] %v1749
          %1814 = vst [vmem:[%s331 + $0x60] sm:$0xf] %v1750
          %1815 = vst [vmem:[%s331 + $0x64] sm:$0xf] %v1751
          %1816 = vst [vmem:[%s331 + $0x68] sm:$0xf] %v1752
          %1817 = vst [vmem:[%s331 + $0x6c] sm:$0xf] %v1753
          %1818 = vst [vmem:[%s331 + $0x70] sm:$0xf] %v1754
          %1819 = vst [vmem:[%s331 + $0x74] sm:$0xf] %v1755
          %1820 = vst [vmem:[%s331 + $0x78] sm:$0xf] %v1756
          %1821 = vst [vmem:[%s331 + $0x7c] sm:$0xf] %v1757
          %1822 = vst [vmem:[%s331 + $0x80] sm:$0xf] %v1758
          %1823 = vst [vmem:[%s331 + $0x84] sm:$0xf] %v1759
          %1824 = vst [vmem:[%s331 + $0x88] sm:$0xf] %v1760
          %1825 = vst [vmem:[%s331 + $0x8c] sm:$0xf] %v1761
          %1826 = vst [vmem:[%s331 + $0x90] sm:$0xf] %v1762
          %1827 = vst [vmem:[%s331 + $0x94] sm:$0xf] %v1763
          %1828 = vst [vmem:[%s331 + $0x98] sm:$0xf] %v1764
          %1829 = vst [vmem:[%s331 + $0x9c] sm:$0xf] %v1765
          %1830 = vst [vmem:[%s331 + $0xa0] sm:$0xf] %v1766
          %1831 = vst [vmem:[%s331 + $0xa4] sm:$0xf] %v1767
          %1832 = vst [vmem:[%s331 + $0xa8] sm:$0xf] %v1768
          %1833 = vst [vmem:[%s331 + $0xac] sm:$0xf] %v1769
          %1834 = vst [vmem:[%s331 + $0xb0] sm:$0xf] %v1770
          %1835 = vst [vmem:[%s331 + $0xb4] sm:$0xf] %v1771
          %1836 = vst [vmem:[%s331 + $0xb8] sm:$0xf] %v1772
          %1837 = vst [vmem:[%s331 + $0xbc] sm:$0xf] %v1773
          %1838 = vst [vmem:[%s331 + $0xc0] sm:$0xf] %v1774
          %1839 = vst [vmem:[%s331 + $0xc4] sm:$0xf] %v1775
          %1840 = vst [vmem:[%s331 + $0xc8] sm:$0xf] %v1776
          %1841 = vst [vmem:[%s331 + $0xcc] sm:$0xf] %v1777
          %1842 = vst [vmem:[%s331 + $0xd0] sm:$0xf] %v1778
          %1843 = vst [vmem:[%s331 + $0xd4] sm:$0xf] %v1779
          %1844 = vst [vmem:[%s331 + $0xd8] sm:$0xf] %v1780
          %1845 = vst [vmem:[%s331 + $0xdc] sm:$0xf] %v1781
          %1846 = vst [vmem:[%s331 + $0xe0] sm:$0xf] %v1782
          %1847 = vst [vmem:[%s331 + $0xe4] sm:$0xf] %v1783
          %1848 = vst [vmem:[%s331 + $0xe8] sm:$0xf] %v1784
          %1849 = vst [vmem:[%s331 + $0xec] sm:$0xf] %v1785
          %1850 = vst [vmem:[%s331 + $0xf0] sm:$0xf] %v1786
          %1851 = vst [vmem:[%s331 + $0xf4] sm:$0xf] %v1787
          %1852 = vst [vmem:[%s331 + $0xf8] sm:$0xf] %v1788
          %1853 = vst [vmem:[%s331 + $0xfc] sm:$0xf] %v1789
        $region56: #{tpu_custom_call.1} parent=39 // pred_fallthru
          _
        %s1854 = sand.u32 %s186, 1
        %s1855 = scalar_lea.sflag [#allocation5], %s1854
        %s1856 = sand.u32 %s186, 1
        %s1857 = smul.addr %s1856, 256
        %s1858 = scalar_lea.vmem [#allocation8], %s1857
        // Predicated region
        $region57: #{tpu_custom_call.1} parent=39 // pred_check
          %p1859 = pneg %p196
        $region58: #{tpu_custom_call.1} parent=39 // pred_check_branch
          %1861 = sbr.rel (%p1859) target = $region60
        $region59: #{tpu_custom_call.1} parent=39 // pred_region
          %s1862 = smul.u32 64, %s28
          %1864 = vsyncadd %s1855, 0
          %s1865 = sadd.s32 %s29, %s1862
          %s1866 = smul.addr %s1865, 4
          %s1867 = scalar_lea.hbm %s5, %s1866
          %s1868 = sshll.u32 %s1858, 4
          %s1869 = int_to_ptr.vmem [resolvable:$true] %s1868
          %s1870 = sshll.u32 %s1867, 4
          %s1871 = int_to_ptr.hbm [resolvable:$true] %s1870
          %1876 = dma.vmem_to_hbm [thread:$0]  %s1869, 4096, %s1871, %s1855, 64, 64, 4
        $region60: #{tpu_custom_call.1} parent=39 // pred_fallthru
          _
      $region40: #{tpu_custom_call.1} parent=5 // pred_fallthru
        _
      %p1877 = scmp.le.s32.totalorder 2, %s18
      // Predicated region
      $region61: #{tpu_custom_call.1} parent=5 // pred_check
        %p1878 = pneg %p1877
      $region62: #{tpu_custom_call.1} parent=5 // pred_check_branch
        %1880 = sbr.rel (%p1878) target = $region64
      $region63: #{tpu_custom_call.1} parent=5 // pred_region
        %s1881 = ssub.s32 %s18, 2
        // Predicated region
        $region65: #{tpu_custom_call.1} parent=63 // pred_check
          %p1882 = pneg %p202
        $region66: #{tpu_custom_call.1} parent=63 // pred_check_branch
          %1884 = sbr.rel (%p1882) target = $region68
        $region67: #{tpu_custom_call.1} parent=63 // pred_region
          %s1885 = sand.u32 %s187, 1
          %s1886 = scalar_lea.sflag [#allocation5], %s1885
          %s1887 = sand.u32 %s187, 1
          %s1888 = smul.addr %s1887, 256
          %s1889 = scalar_lea.vmem [#allocation8], %s1888
          %1891 = dma.done %s1886, 4096
        $region68: #{tpu_custom_call.1} parent=63 // pred_fallthru
          _
      $region64: #{tpu_custom_call.1} parent=5 // pred_fallthru
        _
    $region6: #{tpu_custom_call.1} parent=1 // loop_footer
      %s22 = sadd.s32 1, %s18
    $region7: #{tpu_custom_call.1} parent=1 // loop_footer_branch
      %17 = sbr.rel target = $region3
    $region8: #{tpu_custom_call.1} parent=1 // loop_exit
      _
    %1892 = vsyncpa [#allocation4], 1
    %s1893 = scalar_lea.sflag [#allocation4], 1
    %1894 = vsyncpa %s1893, 1
    %1895 = vsyncpa [#allocation7], 1
    %1896 = vsyncpa [#allocation5], 1
    %s1897 = scalar_lea.sflag [#allocation5], 1
    %1898 = vsyncpa %s1897, 1

</llo_original>
